<compile_context>
chip_gen: v7x
topology: tpu7x:2x2x1
jax: 0.10.0
libtpu: 0.0.40
codegen_flags: <defaults>
</compile_context>

<pallas_src>
import functools

import jax
import jax.numpy as jnp
from jax.experimental import pallas as pl
from jax.experimental.pallas import tpu as pltpu


# ---------------------------------------------------------------------------
# kernels
# ---------------------------------------------------------------------------
def _gcn_layer_kernel(a_ref, hin_ref, w_ref, b_ref,        # inputs
                      hout_ref,                             # output
                      xw_ref, acc_ref,                      # scratch
                      *, tk):
    """One GCN layer: Hout = relu(A @ (Hin @ W) + b), tiled over A."""
    i = pl.program_id(0)          # row tile of A
    k = pl.program_id(1)          # col tile of A (reduction axis, last/fastest)
    nk = pl.num_programs(1)
    koff = pl.multiple_of(k * tk, tk)

    # Compute the (tk, Hp) slice of the dense transform Hin @ W once, on the
    # first row-tile pass; it stays resident in VMEM scratch for later rows.
    @pl.when(i == 0)
    def _():
        xw = jnp.dot(hin_ref[pl.ds(koff, tk), :], w_ref[...],
                     preferred_element_type=jnp.float32)
        xw_ref[pl.ds(koff, tk), :] = xw.astype(xw_ref.dtype)

    @pl.when(k == 0)
    def _():
        acc_ref[...] = jnp.zeros_like(acc_ref)

    # Aggregation: bf16 MXU matmul, f32 accumulation.
    acc_ref[...] += jnp.dot(a_ref[...], xw_ref[pl.ds(koff, tk), :],
                            preferred_element_type=jnp.float32)

    @pl.when(k == nk - 1)
    def _():
        hout_ref[...] = jnp.maximum(acc_ref[...] + b_ref[...],
                                    0.0).astype(hout_ref.dtype)


def _gcn_layer_pool_head_kernel(a_ref, hin_ref, w_ref, b_ref, wh_ref, bh_ref,
                                head_ref,
                                xw_ref, acc_ref, pool_ref,
                                *, tm, tk, n_real):
    """Second GCN layer fused with node-mean pool and the (mu||logvar) head."""
    i = pl.program_id(0)
    k = pl.program_id(1)
    ni = pl.num_programs(0)
    nk = pl.num_programs(1)
    koff = pl.multiple_of(k * tk, tk)

    @pl.when(jnp.logical_and(i == 0, k == 0))
    def _():
        pool_ref[...] = jnp.zeros_like(pool_ref)

    @pl.when(i == 0)
    def _():
        xw = jnp.dot(hin_ref[pl.ds(koff, tk), :], w_ref[...],
                     preferred_element_type=jnp.float32)
        xw_ref[pl.ds(koff, tk), :] = xw.astype(xw_ref.dtype)

    @pl.when(k == 0)
    def _():
        acc_ref[...] = jnp.zeros_like(acc_ref)

    acc_ref[...] += jnp.dot(a_ref[...], xw_ref[pl.ds(koff, tk), :],
                            preferred_element_type=jnp.float32)

    # Per-row-tile finalize: ReLU + bias, mask padded node rows, add to pool.
    @pl.when(k == nk - 1)
    def _():
        h2 = jnp.maximum(acc_ref[...] + b_ref[...], 0.0)          # (tm, Hp) f32
        row = jax.lax.broadcasted_iota(jnp.int32, h2.shape, 0) + i * tm
        h2 = jnp.where(row < n_real, h2, 0.0)                     # drop pad rows
        pool_ref[...] += jnp.sum(h2, axis=0, keepdims=True)

    # Global finalize: mean over real nodes, fused lane-dense head matmul.
    @pl.when(jnp.logical_and(i == ni - 1, k == nk - 1))
    def _():
        pooled = pool_ref[...] * (1.0 / float(n_real))            # (1, Hp) f32
        head_ref[...] = (jnp.dot(pooled, wh_ref[...],
                                 preferred_element_type=jnp.float32)
                         + bh_ref[...]).astype(head_ref.dtype)


# ---------------------------------------------------------------------------
# pallas_call wrappers
# ---------------------------------------------------------------------------
def _compiler_params():
    return pltpu.CompilerParams(
        dimension_semantics=("arbitrary", "arbitrary"),
        vmem_limit_bytes=48 * 1024 * 1024,   # fits v7x's 64 MiB physical VMEM
    )


def _gcn_layer(a, hin, w, b, tm, tk):
    np_, cin = hin.shape
    hp = w.shape[1]
    ni, nk = np_ // tm, np_ // tk
    flops = 2 * np_ * np_ * hp + 2 * np_ * cin * hp
    bytes_accessed = (a.size * 2 + hin.size * 2 + w.size * 2
                      + b.size * 4 + np_ * hp * 2)
    return pl.pallas_call(
        functools.partial(_gcn_layer_kernel, tk=tk),
        out_shape=jax.ShapeDtypeStruct((np_, hp), jnp.bfloat16),
        grid_spec=pltpu.PrefetchScalarGridSpec(
            num_scalar_prefetch=0,
            grid=(ni, nk),
            in_specs=[
                pl.BlockSpec((tm, tk), lambda i, k: (i, k)),      # A: streamed
                pl.BlockSpec((np_, cin), lambda i, k: (0, 0)),    # Hin: resident
                pl.BlockSpec((cin, hp), lambda i, k: (0, 0)),     # W:  resident
                pl.BlockSpec((1, hp), lambda i, k: (0, 0)),       # b
            ],
            out_specs=pl.BlockSpec((tm, hp), lambda i, k: (i, 0)),
            scratch_shapes=[
                pltpu.VMEM((np_, hp), jnp.bfloat16),   # resident Hin @ W
                pltpu.VMEM((tm, hp), jnp.float32),     # f32 accumulator
            ]),
        compiler_params=_compiler_params(),
        cost_estimate=pl.CostEstimate(flops=flops, transcendentals=0,
                                      bytes_accessed=bytes_accessed),
    )(a, hin, w, b)


def _gcn_layer_pool_head(a, hin, w, b, whead, bhead, n_real, tm, tk):
    np_, cin = hin.shape
    hp = w.shape[1]
    lp = whead.shape[1]
    ni, nk = np_ // tm, np_ // tk
    flops = 2 * np_ * np_ * hp + 2 * np_ * cin * hp + 2 * hp * lp
    bytes_accessed = (a.size * 2 + hin.size * 2 + w.size * 2
                      + whead.size * 4 + lp * 4)
    return pl.pallas_call(
        functools.partial(_gcn_layer_pool_head_kernel,
                          tm=tm, tk=tk, n_real=n_real),
        out_shape=jax.ShapeDtypeStruct((1, lp), jnp.float32),
        grid_spec=pltpu.PrefetchScalarGridSpec(
            num_scalar_prefetch=0,
            grid=(ni, nk),
            in_specs=[
                pl.BlockSpec((tm, tk), lambda i, k: (i, k)),      # A: streamed
                pl.BlockSpec((np_, cin), lambda i, k: (0, 0)),    # H1: resident
                pl.BlockSpec((cin, hp), lambda i, k: (0, 0)),     # W2
                pl.BlockSpec((1, hp), lambda i, k: (0, 0)),       # b2
                pl.BlockSpec((hp, lp), lambda i, k: (0, 0)),      # fused head W
                pl.BlockSpec((1, lp), lambda i, k: (0, 0)),       # fused head b
            ],
            out_specs=pl.BlockSpec((1, lp), lambda i, k: (0, 0)),
            scratch_shapes=[
                pltpu.VMEM((np_, hp), jnp.bfloat16),   # resident H1 @ W2
                pltpu.VMEM((tm, hp), jnp.float32),     # f32 accumulator
                pltpu.VMEM((1, hp), jnp.float32),      # node-sum pool
            ]),
        compiler_params=_compiler_params(),
        cost_estimate=pl.CostEstimate(flops=flops, transcendentals=0,
                                      bytes_accessed=bytes_accessed),
    )(a, hin, w, b, whead, bhead)


# ---------------------------------------------------------------------------
# glue (plain JAX) + forward
# ---------------------------------------------------------------------------
def _round_up(x, m):
    return ((x + m - 1) // m) * m


def _pad2(x, rows, cols):
    return jnp.pad(x, ((0, rows - x.shape[0]), (0, cols - x.shape[1])))


def build_norm_adj(edge_index, num_nodes):
    """Dense D^{-1/2} (A + I) D^{-1/2} from edge_index [2, E] (glue, plain JAX)."""
    src, dst = edge_index[0], edge_index[1]
    adj = jnp.zeros((num_nodes, num_nodes), jnp.float32)
    adj = adj.at[dst, src].add(1.0)                          # message src -> dst
    adj = adj + jnp.eye(num_nodes, dtype=jnp.float32)        # self-loops
    deg = adj.sum(axis=1)
    dinv = jax.lax.rsqrt(jnp.maximum(deg, 1e-12))
    return dinv[:, None] * adj * dinv[None, :]
    # TODO(synk): for genuinely sparse graphs at scale, replace the dense A with
    # a CSR gather path (scalar-prefetched offsets + manual DMA).


@functools.partial(jax.jit, static_argnames=("num_nodes",))
def graph_encoder_forward(params, x, edge_index, num_nodes):
    n = num_nodes
    c = x.shape[1]
    h = params["w1"].shape[1]
    l = params["wmu"].shape[1]

    # Tile sizes: 128 keeps v5e's 4x128 MXU happy at small N; 256 for larger N
    # (v6e/v7x 2x256 MXU) while amortizing per-grid-step overhead.
    tm = 128 if n <= 128 else 256
    tk = tm

    np_ = _round_up(n, tm)
    cp = _round_up(c, 128)
    hp = _round_up(h, 128)
    lp = _round_up(2 * l, 128)          # fused mu||logvar head, lane-dense

    # bf16 matmul operands (MXU-native), f32 biases / accumulation.
    a = build_norm_adj(edge_index, n)
    a = _pad2(a, np_, np_).astype(jnp.bfloat16)
    xp = _pad2(x, np_, cp).astype(jnp.bfloat16)

    w1 = _pad2(params["w1"], cp, hp).astype(jnp.bfloat16)
    b1 = _pad2(params["b1"], 1, hp).astype(jnp.float32)
    w2 = _pad2(params["w2"], hp, hp).astype(jnp.bfloat16)
    b2 = _pad2(params["b2"], 1, hp).astype(jnp.float32)

    whead = jnp.concatenate([params["wmu"], params["wlv"]], axis=1)   # [H, 2L]
    bhead = jnp.concatenate([params["bmu"], params["blv"]], axis=1)   # [1, 2L]
    whead = _pad2(whead, hp, lp).astype(jnp.float32)
    bhead = _pad2(bhead, 1, lp).astype(jnp.float32)

    h1 = _gcn_layer(a, xp, w1, b1, tm, tk)                            # [Np, Hp] bf16
    head = _gcn_layer_pool_head(a, h1, w2, b2, whead, bhead, n, tm, tk)  # [1, Lp]

    mu = head[0, :l]
    logvar = head[0, l:2 * l]
    return mu, logvar


# ---------------------------------------------------------------------------
# params, reference, test
# ---------------------------------------------------------------------------
def init_params(key, in_channels, hidden_dim, latent_dim):
    ks = jax.random.split(key, 8)
    scale = 0.1

    def w(k, shape):
        return (scale * jax.random.normal(k, shape)).astype(jnp.float32)

    return {
        "w1": w(ks[0], (in_channels, hidden_dim)),
        "b1": w(ks[1], (1, hidden_dim)),
        "w2": w(ks[2], (hidden_dim, hidden_dim)),
        "b2": w(ks[3], (1, hidden_dim)),
        "wmu": w(ks[4], (hidden_dim, latent_dim)),
        "bmu": w(ks[5], (1, latent_dim)),
        "wlv": w(ks[6], (hidden_dim, latent_dim)),
        "blv": w(ks[7], (1, latent_dim)),
    }


def reference_forward(params, x, edge_index, num_nodes):
    """Pure-JAX f32 reference matching the PyTorch forward."""
    a = build_norm_adj(edge_index, num_nodes)
    h = jnp.maximum(a @ (x @ params["w1"]) + params["b1"], 0.0)
    h = jnp.maximum(a @ (h @ params["w2"]) + params["b2"], 0.0)
    pooled = h.mean(axis=0)
    mu = pooled @ params["wmu"] + params["bmu"][0]
    lv = pooled @ params["wlv"] + params["blv"][0]
    return mu, lv


if __name__ == "__main__":
    num_nodes = 16
    in_channels = 8
    hidden_dim = 32
    latent_dim = 16

    key = jax.random.PRNGKey(0)
    k_x, k_p = jax.random.split(key)

    x = jax.random.normal(k_x, (num_nodes, in_channels), dtype=jnp.float32)

    # simple bidirectional ring graph
    src = jnp.arange(num_nodes, dtype=jnp.int32)
    dst = (src + 1) % num_nodes
    edge_index = jnp.stack([jnp.concatenate([src, dst]),
                            jnp.concatenate([dst, src])], axis=0)  # [2, 2N]

    params = init_params(k_p, in_channels, hidden_dim, latent_dim)

    mu, logvar = graph_encoder_forward(params, x, edge_index, num_nodes)
    jax.block_until_ready((mu, logvar))

    mu_ref, lv_ref = reference_forward(params, x, edge_index, num_nodes)
    # bf16 matmul inputs (f32 accumulation) => relaxed tolerance vs f32 reference.
    assert mu.shape == (latent_dim,) and logvar.shape == (latent_dim,)
    assert jnp.allclose(mu, mu_ref, atol=2e-2, rtol=2e-2), "mu mismatch"
    assert jnp.allclose(logvar, lv_ref, atol=2e-2, rtol=2e-2), "logvar mismatch"

    print("KERNEL_OK")
</pallas_src>

<mosaic_0001>
module attributes {stable_mosaic.version = 11 : i64} {
  func.func private @main(%arg0: i32) attributes {dimension_semantics = [#tpu.dimension_semantics<core_parallel>], iteration_bounds = array<i64: 2>, tpu.core_type = #tpu.core_type<sc_scalar_subcore>, window_params = []} {
    return
  }
}

module attributes {stable_mosaic.version = 11 : i64} {
  func.func private @main(%arg0: i32) attributes {dimension_semantics = [#tpu.dimension_semantics<core_parallel>], iteration_bounds = array<i64: 2>, tpu.core_type = #tpu.core_type<sc_scalar_subcore>, window_params = []} {
    return
  }
}

module attributes {stable_mosaic.version = 11 : i64} {
  func.func @_gcn_layer_pool_head_kernel(%arg0: i32, %arg1: i32, %arg2: memref<128x128xbf16, #tpu.memory_space<vmem>>, %arg3: memref<128x128xbf16, #tpu.memory_space<vmem>>, %arg4: memref<128x128xbf16, #tpu.memory_space<vmem>>, %arg5: memref<1x128xf32, #tpu.memory_space<vmem>>, %arg6: memref<128x128xf32, #tpu.memory_space<vmem>>, %arg7: memref<1x128xf32, #tpu.memory_space<vmem>>, %arg8: memref<1x128xf32, #tpu.memory_space<vmem>>, %arg9: memref<128x128xbf16, #tpu.memory_space<vmem>>, %arg10: memref<128x128xf32, #tpu.memory_space<vmem>>, %arg11: memref<1x128xf32, #tpu.memory_space<vmem>>) attributes {dimension_semantics = [#tpu.dimension_semantics<arbitrary>, #tpu.dimension_semantics<arbitrary>], iteration_bounds = array<i64: 1, 1>, scalar_prefetch = 0 : i64, scratch_operands = 3 : i64, tpu.core_type = #tpu.core_type<tc>, window_params = [{transform_indices = @transform_0, window_bounds = array<i64: 128, 128>}, {pipeline_mode = #tpu.pipeline_mode<synchronous>, transform_indices = @transform_1, window_bounds = array<i64: 128, 128>}, {pipeline_mode = #tpu.pipeline_mode<synchronous>, transform_indices = @transform_2, window_bounds = array<i64: 128, 128>}, {pipeline_mode = #tpu.pipeline_mode<synchronous>, transform_indices = @transform_3, window_bounds = array<i64: 1, 128>}, {pipeline_mode = #tpu.pipeline_mode<synchronous>, transform_indices = @transform_4, window_bounds = array<i64: 128, 128>}, {pipeline_mode = #tpu.pipeline_mode<synchronous>, transform_indices = @transform_5, window_bounds = array<i64: 1, 128>}, {pipeline_mode = #tpu.pipeline_mode<synchronous>, transform_indices = @transform_6, window_bounds = array<i64: 1, 128>}]} {
    %c128_i32 = arith.constant 128 : i32
    %0 = arith.muli %arg1, %c128_i32 : i32
    %1 = tpu.assume_multiple %0, 128 : i32
    %c0_i32 = arith.constant 0 : i32
    %2 = arith.cmpi eq, %arg0, %c0_i32 : i32
    %c0_i32_0 = arith.constant 0 : i32
    %3 = arith.cmpi eq, %arg1, %c0_i32_0 : i32
    %4 = arith.andi %2, %3 : i1
    %5 = arith.extui %4 : i1 to i32
    %c0_i32_1 = arith.constant 0 : i32
    %6 = arith.cmpi ne, %5, %c0_i32_1 : i32
    scf.if %6 {
      %cst_17 = arith.constant 0.000000e+00 : f32
      %28 = vector.broadcast %cst_17 : f32 to vector<1x128xf32>
      %c0_18 = arith.constant 0 : index
      %c0_19 = arith.constant 0 : index
      %29 = vector.load %arg11[%c0_18, %c0_19] : memref<1x128xf32, #tpu.memory_space<vmem>>, vector<1x128xf32>
      tpu.vector_store %arg11[%c0_18, %c0_19], %28 {strides = array<i32>} : memref<1x128xf32, #tpu.memory_space<vmem>>, vector<1x128xf32>,
    } else {
    }
    %c0_i32_2 = arith.constant 0 : i32
    %7 = arith.cmpi eq, %arg0, %c0_i32_2 : i32
    %8 = arith.extui %7 : i1 to i32
    %c0_i32_3 = arith.constant 0 : i32
    %9 = arith.cmpi ne, %8, %c0_i32_3 : i32
    scf.if %9 {
      %28 = arith.index_cast %1 : i32 to index
      %c0_17 = arith.constant 0 : index
      %29 = vector.load %arg3[%28, %c0_17] : memref<128x128xbf16, #tpu.memory_space<vmem>>, vector<128x128xbf16>
      %c0_18 = arith.constant 0 : index
      %c0_19 = arith.constant 0 : index
      %30 = vector.load %arg4[%c0_18, %c0_19] : memref<128x128xbf16, #tpu.memory_space<vmem>>, vector<128x128xbf16>
      %cst_20 = arith.constant dense<0.000000e+00> : vector<128x128xf32>
      %31 = tpu.matmul %29, %30, %cst_20 {dimension_numbers = #tpu.dot_dimension_numbers<[1], [0], [0], [1], [0, 0, 1, 1], [], []>} : vector<128x128xbf16>, vector<128x128xbf16>, vector<128x128xf32> -> vector<128x128xf32>
      %32 = arith.truncf %31 : vector<128x128xf32> to vector<128x128xbf16>
      %33 = arith.index_cast %1 : i32 to index
      %c0_21 = arith.constant 0 : index
      %34 = vector.load %arg9[%33, %c0_21] : memref<128x128xbf16, #tpu.memory_space<vmem>>, vector<128x128xbf16>
      tpu.vector_store %arg9[%33, %c0_21], %32 {strides = array<i32>} : memref<128x128xbf16, #tpu.memory_space<vmem>>, vector<128x128xbf16>,
    } else {
    }
    %c0_i32_4 = arith.constant 0 : i32
    %10 = arith.cmpi eq, %arg1, %c0_i32_4 : i32
    %11 = arith.extui %10 : i1 to i32
    %c0_i32_5 = arith.constant 0 : i32
    %12 = arith.cmpi ne, %11, %c0_i32_5 : i32
    scf.if %12 {
      %cst_17 = arith.constant 0.000000e+00 : f32
      %28 = vector.broadcast %cst_17 : f32 to vector<128x128xf32>
      %c0_18 = arith.constant 0 : index
      %c0_19 = arith.constant 0 : index
      %29 = vector.load %arg10[%c0_18, %c0_19] : memref<128x128xf32, #tpu.memory_space<vmem>>, vector<128x128xf32>
      tpu.vector_store %arg10[%c0_18, %c0_19], %28 {strides = array<i32>} : memref<128x128xf32, #tpu.memory_space<vmem>>, vector<128x128xf32>,
    } else {
    }
    %c0 = arith.constant 0 : index
    %c0_6 = arith.constant 0 : index
    %13 = vector.load %arg10[%c0, %c0_6] : memref<128x128xf32, #tpu.memory_space<vmem>>, vector<128x128xf32>
    %c0_7 = arith.constant 0 : index
    %c0_8 = arith.constant 0 : index
    %14 = vector.load %arg2[%c0_7, %c0_8] : memref<128x128xbf16, #tpu.memory_space<vmem>>, vector<128x128xbf16>
    %15 = arith.index_cast %1 : i32 to index
    %c0_9 = arith.constant 0 : index
    %16 = vector.load %arg9[%15, %c0_9] : memref<128x128xbf16, #tpu.memory_space<vmem>>, vector<128x128xbf16>
    %cst = arith.constant dense<0.000000e+00> : vector<128x128xf32>
    %17 = tpu.matmul %14, %16, %cst {dimension_numbers = #tpu.dot_dimension_numbers<[1], [0], [0], [1], [0, 0, 1, 1], [], []>} : vector<128x128xbf16>, vector<128x128xbf16>, vector<128x128xf32> -> vector<128x128xf32>
    %18 = arith.addf %13, %17 : vector<128x128xf32>
    %c0_10 = arith.constant 0 : index
    %c0_11 = arith.constant 0 : index
    %19 = vector.load %arg10[%c0_10, %c0_11] : memref<128x128xf32, #tpu.memory_space<vmem>>, vector<128x128xf32>
    tpu.vector_store %arg10[%c0_10, %c0_11], %18 {strides = array<i32>} : memref<128x128xf32, #tpu.memory_space<vmem>>, vector<128x128xf32>,
    %c0_i32_12 = arith.constant 0 : i32
    %20 = arith.cmpi eq, %arg1, %c0_i32_12 : i32
    %21 = arith.extui %20 : i1 to i32
    %c0_i32_13 = arith.constant 0 : i32
    %22 = arith.cmpi ne, %21, %c0_i32_13 : i32
    scf.if %22 {
      %c0_17 = arith.constant 0 : index
      %c0_18 = arith.constant 0 : index
      %28 = vector.load %arg10[%c0_17, %c0_18] : memref<128x128xf32, #tpu.memory_space<vmem>>, vector<128x128xf32>
      %c0_19 = arith.constant 0 : index
      %c0_20 = arith.constant 0 : index
      %29 = vector.load %arg5[%c0_19, %c0_20] : memref<1x128xf32, #tpu.memory_space<vmem>>, vector<1x128xf32>
      %30 = vector.broadcast %29 : vector<1x128xf32> to vector<128x128xf32>
      %31 = arith.addf %28, %30 : vector<128x128xf32>
      %cst_21 = arith.constant 0.000000e+00 : f32
      %32 = vector.broadcast %cst_21 : f32 to vector<128x128xf32>
      %33 = arith.maximumf %31, %32 : vector<128x128xf32>
      %34 = tpu.iota {dimensions = array<i32: 0>} : vector<128x128xi32>
      %c128_i32_22 = arith.constant 128 : i32
      %35 = arith.muli %arg0, %c128_i32_22 : i32
      %36 = vector.broadcast %35 : i32 to vector<128x128xi32>
      %37 = arith.addi %34, %36 : vector<128x128xi32>
      %c16_i32 = arith.constant 16 : i32
      %38 = vector.broadcast %c16_i32 : i32 to vector<128x128xi32>
      %39 = arith.cmpi slt, %37, %38 : vector<128x128xi32>
      %cst_23 = arith.constant 0.000000e+00 : f32
      %40 = vector.broadcast %cst_23 : f32 to vector<128x128xf32>
      %41 = arith.select %39, %33, %40 : vector<128x128xi1>, vector<128x128xf32>
      %c0_24 = arith.constant 0 : index
      %c0_25 = arith.constant 0 : index
      %42 = vector.load %arg11[%c0_24, %c0_25] : memref<1x128xf32, #tpu.memory_space<vmem>>, vector<1x128xf32>
      %cst_26 = arith.constant dense<0.000000e+00> : vector<128xf32>
      %43 = vector.multi_reduction <add>, %41, %cst_26 [0] : vector<128x128xf32> to vector<128xf32>
      %44 = vector.shape_cast %43 : vector<128xf32> to vector<1x128xf32>
      %45 = arith.addf %42, %44 : vector<1x128xf32>
      %c0_27 = arith.constant 0 : index
      %c0_28 = arith.constant 0 : index
      %46 = vector.load %arg11[%c0_27, %c0_28] : memref<1x128xf32, #tpu.memory_space<vmem>>, vector<1x128xf32>
      tpu.vector_store %arg11[%c0_27, %c0_28], %45 {strides = array<i32>} : memref<1x128xf32, #tpu.memory_space<vmem>>, vector<1x128xf32>,
    } else {
    }
    %c0_i32_14 = arith.constant 0 : i32
    %23 = arith.cmpi eq, %arg0, %c0_i32_14 : i32
    %c0_i32_15 = arith.constant 0 : i32
    %24 = arith.cmpi eq, %arg1, %c0_i32_15 : i32
    %25 = arith.andi %23, %24 : i1
    %26 = arith.extui %25 : i1 to i32
    %c0_i32_16 = arith.constant 0 : i32
    %27 = arith.cmpi ne, %26, %c0_i32_16 : i32
    scf.if %27 {
      %c0_17 = arith.constant 0 : index
      %c0_18 = arith.constant 0 : index
      %28 = vector.load %arg11[%c0_17, %c0_18] : memref<1x128xf32, #tpu.memory_space<vmem>>, vector<1x128xf32>
      %cst_19 = arith.constant 6.250000e-02 : f32
      %29 = vector.broadcast %cst_19 : f32 to vector<1x128xf32>
      %30 = arith.mulf %28, %29 : vector<1x128xf32>
      %c0_20 = arith.constant 0 : index
      %c0_21 = arith.constant 0 : index
      %31 = vector.load %arg6[%c0_20, %c0_21] : memref<128x128xf32, #tpu.memory_space<vmem>>, vector<128x128xf32>
      %cst_22 = arith.constant dense<0.000000e+00> : vector<1x128xf32>
      %32 = tpu.matmul %30, %31, %cst_22 {dimension_numbers = #tpu.dot_dimension_numbers<[1], [0], [0], [1], [0, 0, 1, 1], [], []>} : vector<1x128xf32>, vector<128x128xf32>, vector<1x128xf32> -> vector<1x128xf32>
      %c0_23 = arith.constant 0 : index
      %c0_24 = arith.constant 0 : index
      %33 = vector.load %arg7[%c0_23, %c0_24] : memref<1x128xf32, #tpu.memory_space<vmem>>, vector<1x128xf32>
      %34 = arith.addf %32, %33 : vector<1x128xf32>
      %c0_25 = arith.constant 0 : index
      %c0_26 = arith.constant 0 : index
      %35 = vector.load %arg8[%c0_25, %c0_26] : memref<1x128xf32, #tpu.memory_space<vmem>>, vector<1x128xf32>
      tpu.vector_store %arg8[%c0_25, %c0_26], %34 {strides = array<i32>} : memref<1x128xf32, #tpu.memory_space<vmem>>, vector<1x128xf32>,
    } else {
    }
    return
  }
  func.func @transform_0(%arg0: i32, %arg1: i32) -> (i32, i32) {
    %c0_i32 = arith.constant 0 : i32
    return %arg0, %arg1 : i32, i32
  }
  func.func @transform_1(%arg0: i32, %arg1: i32) -> (i32, i32) {
    %c0_i32 = arith.constant 0 : i32
    %c0_i32_0 = arith.constant 0 : i32
    %c0_i32_1 = arith.constant 0 : i32
    return %c0_i32, %c0_i32_0 : i32, i32
  }
  func.func @transform_2(%arg0: i32, %arg1: i32) -> (i32, i32) {
    %c0_i32 = arith.constant 0 : i32
    %c0_i32_0 = arith.constant 0 : i32
    %c0_i32_1 = arith.constant 0 : i32
    return %c0_i32, %c0_i32_0 : i32, i32
  }
  func.func @transform_3(%arg0: i32, %arg1: i32) -> (i32, i32) {
    %c0_i32 = arith.constant 0 : i32
    %c0_i32_0 = arith.constant 0 : i32
    %c0_i32_1 = arith.constant 0 : i32
    return %c0_i32, %c0_i32_0 : i32, i32
  }
  func.func @transform_4(%arg0: i32, %arg1: i32) -> (i32, i32) {
    %c0_i32 = arith.constant 0 : i32
    %c0_i32_0 = arith.constant 0 : i32
    %c0_i32_1 = arith.constant 0 : i32
    return %c0_i32, %c0_i32_0 : i32, i32
  }
  func.func @transform_5(%arg0: i32, %arg1: i32) -> (i32, i32) {
    %c0_i32 = arith.constant 0 : i32
    %c0_i32_0 = arith.constant 0 : i32
    %c0_i32_1 = arith.constant 0 : i32
    return %c0_i32, %c0_i32_0 : i32, i32
  }
  func.func @transform_6(%arg0: i32, %arg1: i32) -> (i32, i32) {
    %c0_i32 = arith.constant 0 : i32
    %c0_i32_0 = arith.constant 0 : i32
    %c0_i32_1 = arith.constant 0 : i32
    return %c0_i32, %c0_i32_0 : i32, i32
  }
}

module attributes {stable_mosaic.version = 11 : i64} {
  func.func @_gcn_layer_kernel(%arg0: i32, %arg1: i32, %arg2: memref<128x128xbf16, #tpu.memory_space<vmem>>, %arg3: memref<128x128xbf16, #tpu.memory_space<vmem>>, %arg4: memref<128x128xbf16, #tpu.memory_space<vmem>>, %arg5: memref<1x128xf32, #tpu.memory_space<vmem>>, %arg6: memref<128x128xbf16, #tpu.memory_space<vmem>>, %arg7: memref<128x128xbf16, #tpu.memory_space<vmem>>, %arg8: memref<128x128xf32, #tpu.memory_space<vmem>>) attributes {dimension_semantics = [#tpu.dimension_semantics<arbitrary>, #tpu.dimension_semantics<arbitrary>], iteration_bounds = array<i64: 1, 1>, scalar_prefetch = 0 : i64, scratch_operands = 2 : i64, tpu.core_type = #tpu.core_type<tc>, window_params = [{transform_indices = @transform_0, window_bounds = array<i64: 128, 128>}, {pipeline_mode = #tpu.pipeline_mode<synchronous>, transform_indices = @transform_1, window_bounds = array<i64: 128, 128>}, {pipeline_mode = #tpu.pipeline_mode<synchronous>, transform_indices = @transform_2, window_bounds = array<i64: 128, 128>}, {pipeline_mode = #tpu.pipeline_mode<synchronous>, transform_indices = @transform_3, window_bounds = array<i64: 1, 128>}, {transform_indices = @transform_4, window_bounds = array<i64: 128, 128>}]} {
    %c128_i32 = arith.constant 128 : i32
    %0 = arith.muli %arg1, %c128_i32 : i32
    %1 = tpu.assume_multiple %0, 128 : i32
    %c0_i32 = arith.constant 0 : i32
    %2 = arith.cmpi eq, %arg0, %c0_i32 : i32
    %3 = arith.extui %2 : i1 to i32
    %c0_i32_0 = arith.constant 0 : i32
    %4 = arith.cmpi ne, %3, %c0_i32_0 : i32
    scf.if %4 {
      %18 = arith.index_cast %1 : i32 to index
      %c0_11 = arith.constant 0 : index
      %19 = vector.load %arg3[%18, %c0_11] : memref<128x128xbf16, #tpu.memory_space<vmem>>, vector<128x128xbf16>
      %c0_12 = arith.constant 0 : index
      %c0_13 = arith.constant 0 : index
      %20 = vector.load %arg4[%c0_12, %c0_13] : memref<128x128xbf16, #tpu.memory_space<vmem>>, vector<128x128xbf16>
      %cst_14 = arith.constant dense<0.000000e+00> : vector<128x128xf32>
      %21 = tpu.matmul %19, %20, %cst_14 {dimension_numbers = #tpu.dot_dimension_numbers<[1], [0], [0], [1], [0, 0, 1, 1], [], []>} : vector<128x128xbf16>, vector<128x128xbf16>, vector<128x128xf32> -> vector<128x128xf32>
      %22 = arith.truncf %21 : vector<128x128xf32> to vector<128x128xbf16>
      %23 = arith.index_cast %1 : i32 to index
      %c0_15 = arith.constant 0 : index
      %24 = vector.load %arg7[%23, %c0_15] : memref<128x128xbf16, #tpu.memory_space<vmem>>, vector<128x128xbf16>
      tpu.vector_store %arg7[%23, %c0_15], %22 {strides = array<i32>} : memref<128x128xbf16, #tpu.memory_space<vmem>>, vector<128x128xbf16>,
    } else {
    }
    %c0_i32_1 = arith.constant 0 : i32
    %5 = arith.cmpi eq, %arg1, %c0_i32_1 : i32
    %6 = arith.extui %5 : i1 to i32
    %c0_i32_2 = arith.constant 0 : i32
    %7 = arith.cmpi ne, %6, %c0_i32_2 : i32
    scf.if %7 {
      %cst_11 = arith.constant 0.000000e+00 : f32
      %18 = vector.broadcast %cst_11 : f32 to vector<128x128xf32>
      %c0_12 = arith.constant 0 : index
      %c0_13 = arith.constant 0 : index
      %19 = vector.load %arg8[%c0_12, %c0_13] : memref<128x128xf32, #tpu.memory_space<vmem>>, vector<128x128xf32>
      tpu.vector_store %arg8[%c0_12, %c0_13], %18 {strides = array<i32>} : memref<128x128xf32, #tpu.memory_space<vmem>>, vector<128x128xf32>,
    } else {
    }
    %c0 = arith.constant 0 : index
    %c0_3 = arith.constant 0 : index
    %8 = vector.load %arg8[%c0, %c0_3] : memref<128x128xf32, #tpu.memory_space<vmem>>, vector<128x128xf32>
    %c0_4 = arith.constant 0 : index
    %c0_5 = arith.constant 0 : index
    %9 = vector.load %arg2[%c0_4, %c0_5] : memref<128x128xbf16, #tpu.memory_space<vmem>>, vector<128x128xbf16>
    %10 = arith.index_cast %1 : i32 to index
    %c0_6 = arith.constant 0 : index
    %11 = vector.load %arg7[%10, %c0_6] : memref<128x128xbf16, #tpu.memory_space<vmem>>, vector<128x128xbf16>
    %cst = arith.constant dense<0.000000e+00> : vector<128x128xf32>
    %12 = tpu.matmul %9, %11, %cst {dimension_numbers = #tpu.dot_dimension_numbers<[1], [0], [0], [1], [0, 0, 1, 1], [], []>} : vector<128x128xbf16>, vector<128x128xbf16>, vector<128x128xf32> -> vector<128x128xf32>
    %13 = arith.addf %8, %12 : vector<128x128xf32>
    %c0_7 = arith.constant 0 : index
    %c0_8 = arith.constant 0 : index
    %14 = vector.load %arg8[%c0_7, %c0_8] : memref<128x128xf32, #tpu.memory_space<vmem>>, vector<128x128xf32>
    tpu.vector_store %arg8[%c0_7, %c0_8], %13 {strides = array<i32>} : memref<128x128xf32, #tpu.memory_space<vmem>>, vector<128x128xf32>,
    %c0_i32_9 = arith.constant 0 : i32
    %15 = arith.cmpi eq, %arg1, %c0_i32_9 : i32
    %16 = arith.extui %15 : i1 to i32
    %c0_i32_10 = arith.constant 0 : i32
    %17 = arith.cmpi ne, %16, %c0_i32_10 : i32
    scf.if %17 {
      %c0_11 = arith.constant 0 : index
      %c0_12 = arith.constant 0 : index
      %18 = vector.load %arg8[%c0_11, %c0_12] : memref<128x128xf32, #tpu.memory_space<vmem>>, vector<128x128xf32>
      %c0_13 = arith.constant 0 : index
      %c0_14 = arith.constant 0 : index
      %19 = vector.load %arg5[%c0_13, %c0_14] : memref<1x128xf32, #tpu.memory_space<vmem>>, vector<1x128xf32>
      %20 = vector.broadcast %19 : vector<1x128xf32> to vector<128x128xf32>
      %21 = arith.addf %18, %20 : vector<128x128xf32>
      %cst_15 = arith.constant 0.000000e+00 : f32
      %22 = vector.broadcast %cst_15 : f32 to vector<128x128xf32>
      %23 = arith.maximumf %21, %22 : vector<128x128xf32>
      %24 = arith.truncf %23 : vector<128x128xf32> to vector<128x128xbf16>
      %c0_16 = arith.constant 0 : index
      %c0_17 = arith.constant 0 : index
      %25 = vector.load %arg6[%c0_16, %c0_17] : memref<128x128xbf16, #tpu.memory_space<vmem>>, vector<128x128xbf16>
      tpu.vector_store %arg6[%c0_16, %c0_17], %24 {strides = array<i32>} : memref<128x128xbf16, #tpu.memory_space<vmem>>, vector<128x128xbf16>,
    } else {
    }
    return
  }
  func.func @transform_0(%arg0: i32, %arg1: i32) -> (i32, i32) {
    %c0_i32 = arith.constant 0 : i32
    return %arg0, %arg1 : i32, i32
  }
  func.func @transform_1(%arg0: i32, %arg1: i32) -> (i32, i32) {
    %c0_i32 = arith.constant 0 : i32
    %c0_i32_0 = arith.constant 0 : i32
    %c0_i32_1 = arith.constant 0 : i32
    return %c0_i32, %c0_i32_0 : i32, i32
  }
  func.func @transform_2(%arg0: i32, %arg1: i32) -> (i32, i32) {
    %c0_i32 = arith.constant 0 : i32
    %c0_i32_0 = arith.constant 0 : i32
    %c0_i32_1 = arith.constant 0 : i32
    return %c0_i32, %c0_i32_0 : i32, i32
  }
  func.func @transform_3(%arg0: i32, %arg1: i32) -> (i32, i32) {
    %c0_i32 = arith.constant 0 : i32
    %c0_i32_0 = arith.constant 0 : i32
    %c0_i32_1 = arith.constant 0 : i32
    return %c0_i32, %c0_i32_0 : i32, i32
  }
  func.func @transform_4(%arg0: i32, %arg1: i32) -> (i32, i32) {
    %c0_i32 = arith.constant 0 : i32
    %c0_i32_0 = arith.constant 0 : i32
    return %arg0, %c0_i32 : i32, i32
  }
}

</mosaic_0001>

<llo_original>
// kernel: graph_encoder_forward.3
$region0: #{graph_encoder_forward.3}
  #allocation0 [shape = 'u32[]', space=smem, size = 0x4, offset = 0x4, fixed_abs, tag = 'smem constant byte address 0x4 - core index']
  #allocation1 [shape = 'u32[144,128]{1,0:T(1,128)}', space=vmem, size = 0x12000, scoped, tag = 'internal scratch']
  #allocation2 [shape = 'bf16[128,128]{1,0:T(16,128)(2,1)}', space=vmem, size = 0x8000, scoped, tag = 'scratch operand']
  #allocation3 [shape = 'f32[128,128]{1,0:T(8,128)}', space=vmem, size = 0x10000, scoped, tag = 'scratch operand']
  #allocation4 [shape = 'f32[1,128]{1,0:T(1,128)}', space=vmem, size = 0x200, scoped, tag = 'scratch operand']
  %s0 = inlined_call_operand.vmem [shape: bf16[128,128], index: 0, kind: input, shape index: {}]
  %s1 = inlined_call_operand.vmem [shape: bf16[128,128], index: 1, kind: input, shape index: {}]
  %s2 = inlined_call_operand.vmem [shape: bf16[128,128], index: 2, kind: input, shape index: {}]
  %s3 = inlined_call_operand.vmem [shape: f32[1,128], index: 3, kind: input, shape index: {}]
  %s4 = inlined_call_operand.vmem [shape: f32[128,128], index: 4, kind: input, shape index: {}]
  %s5 = inlined_call_operand.vmem [shape: f32[1,128], index: 5, kind: input, shape index: {}]
  %s6 = inlined_call_operand.vmem [shape: f32[1,128], index: 6, kind: output, shape index: {}]
  %s7 = sld [smem:[#allocation0]]
  $region54: #{graph_encoder_forward.3} parent=0
    _
  %s9 = ssub.s32 1, %s7
  %s10 = scalar_select 0, %s9, %s7
  // Predicated region
  $region2: #{graph_encoder_forward.3} parent=0 // pred_check
    _
  $region3: #{graph_encoder_forward.3} parent=0 // pred_check_branch
    %12 = sbr.rel (0) target = $region5
  $region4: #{graph_encoder_forward.3} parent=0 // pred_region
    _
  $region5: #{graph_encoder_forward.3} parent=0 // pred_fallthru
    _
  // Predicated region
  $region6: #{graph_encoder_forward.3} parent=0 // pred_check
    _
  $region7: #{graph_encoder_forward.3} parent=0 // pred_check_branch
    %14 = sbr.rel (0) target = $region9
  $region8: #{graph_encoder_forward.3} parent=0 // pred_region
    _
  $region9: #{graph_encoder_forward.3} parent=0 // pred_fallthru
    _
  // Predicated region
  $region10: #{graph_encoder_forward.3} parent=0 // pred_check
    _
  $region11: #{graph_encoder_forward.3} parent=0 // pred_check_branch
    %16 = sbr.rel (0) target = $region13
  $region12: #{graph_encoder_forward.3} parent=0 // pred_region
    _
  $region13: #{graph_encoder_forward.3} parent=0 // pred_fallthru
    _
  // Predicated region
  $region14: #{graph_encoder_forward.3} parent=0 // pred_check
    _
  $region15: #{graph_encoder_forward.3} parent=0 // pred_check_branch
    %18 = sbr.rel (0) target = $region17
  $region16: #{graph_encoder_forward.3} parent=0 // pred_region
    _
  $region17: #{graph_encoder_forward.3} parent=0 // pred_fallthru
    _
  // Predicated region
  $region18: #{graph_encoder_forward.3} parent=0 // pred_check
    _
  $region19: #{graph_encoder_forward.3} parent=0 // pred_check_branch
    %20 = sbr.rel (0) target = $region21
  $region20: #{graph_encoder_forward.3} parent=0 // pred_region
    _
  $region21: #{graph_encoder_forward.3} parent=0 // pred_fallthru
    _
  // Predicated region
  $region22: #{graph_encoder_forward.3} parent=0 // pred_check
    _
  $region23: #{graph_encoder_forward.3} parent=0 // pred_check_branch
    %22 = sbr.rel (0) target = $region25
  $region24: #{graph_encoder_forward.3} parent=0 // pred_region
    _
  $region25: #{graph_encoder_forward.3} parent=0 // pred_fallthru
    _
  %s24 = smul.u32 0, 128
  %p25 = scmp.eq.s32.totalorder 0, 0
  %p26 = scmp.eq.s32.totalorder 0, 0
  %p27 = pnand %p25, %p26
  %p28 = pneg %p27
  // Predicated region
  $region26: #{graph_encoder_forward.3} parent=0 // pred_check
    _
  $region27: #{graph_encoder_forward.3} parent=0 // pred_check_branch
    %30 = sbr.rel (%p27) target = $region29
  $region28: #{graph_encoder_forward.3} parent=0 // pred_region
    %31 = vst [vmem:[#allocation4] sm:$0x1] 0.0
  $region29: #{graph_encoder_forward.3} parent=0 // pred_fallthru
    _
  // Predicated region
  $region30: #{graph_encoder_forward.3} parent=0 // pred_check
    %p32 = pneg %p25
  $region31: #{graph_encoder_forward.3} parent=0 // pred_check_branch
    %34 = sbr.rel (%p32) target = $region33
  $region32: #{graph_encoder_forward.3} parent=0 // pred_region
    %s35 = sshra.s32 %s24, 3
    %s36 = sand.u32 %s24, 7
    %s37 = smul.addr %s35, 4
    %s38 = scalar_lea.vmem %s1, %s37
    %v39 = vld [vmem:[%s38] sm:$0xf]
    %v40 = vld [vmem:[%s38 + $0x4] sm:$0xf]
    %v41 = vld [vmem:[%s38 + $0x8] sm:$0xf]
    %v42 = vld [vmem:[%s38 + $0xc] sm:$0xf]
    %v43 = vld [vmem:[%s38 + $0x10] sm:$0xf]
    %v44 = vld [vmem:[%s38 + $0x14] sm:$0xf]
    %v45 = vld [vmem:[%s38 + $0x18] sm:$0xf]
    %v46 = vld [vmem:[%s38 + $0x1c] sm:$0xf]
    %v47 = vld [vmem:[%s38 + $0x20] sm:$0xf]
    %v48 = vld [vmem:[%s38 + $0x24] sm:$0xf]
    %v49 = vld [vmem:[%s38 + $0x28] sm:$0xf]
    %v50 = vld [vmem:[%s38 + $0x2c] sm:$0xf]
    %v51 = vld [vmem:[%s38 + $0x30] sm:$0xf]
    %v52 = vld [vmem:[%s38 + $0x34] sm:$0xf]
    %v53 = vld [vmem:[%s38 + $0x38] sm:$0xf]
    %v54 = vld [vmem:[%s38 + $0x3c] sm:$0xf]
    %v55 = vld [vmem:[%s2] sm:$0xf]
    %v56 = vld [vmem:[%s2 + $0x4] sm:$0xf]
    %v57 = vld [vmem:[%s2 + $0x8] sm:$0xf]
    %v58 = vld [vmem:[%s2 + $0xc] sm:$0xf]
    %v59 = vld [vmem:[%s2 + $0x10] sm:$0xf]
    %v60 = vld [vmem:[%s2 + $0x14] sm:$0xf]
    %v61 = vld [vmem:[%s2 + $0x18] sm:$0xf]
    %v62 = vld [vmem:[%s2 + $0x1c] sm:$0xf]
    %v63 = vld [vmem:[%s2 + $0x20] sm:$0xf]
    %v64 = vld [vmem:[%s2 + $0x24] sm:$0xf]
    %v65 = vld [vmem:[%s2 + $0x28] sm:$0xf]
    %v66 = vld [vmem:[%s2 + $0x2c] sm:$0xf]
    %v67 = vld [vmem:[%s2 + $0x30] sm:$0xf]
    %v68 = vld [vmem:[%s2 + $0x34] sm:$0xf]
    %v69 = vld [vmem:[%s2 + $0x38] sm:$0xf]
    %v70 = vld [vmem:[%s2 + $0x3c] sm:$0xf]
    %v87 = vunpack.c.l.b16 %v39
    %v88 = vunpack.c.l.b16 %v40
    %v89 = vunpack.c.l.b16 %v41
    %v90 = vunpack.c.l.b16 %v42
    %v91 = vunpack.c.l.b16 %v43
    %v92 = vunpack.c.l.b16 %v44
    %v93 = vunpack.c.l.b16 %v45
    %v94 = vunpack.c.l.b16 %v46
    %v95 = vunpack.c.l.b16 %v47
    %v96 = vunpack.c.l.b16 %v48
    %v97 = vunpack.c.l.b16 %v49
    %v98 = vunpack.c.l.b16 %v50
    %v99 = vunpack.c.l.b16 %v51
    %v100 = vunpack.c.l.b16 %v52
    %v101 = vunpack.c.l.b16 %v53
    %v102 = vunpack.c.l.b16 %v54
    %v103 = vpack.c.b16 %v88, %v87
    %v104 = vpack.c.b16 %v90, %v89
    %v105 = vpack.c.b16 %v92, %v91
    %v106 = vpack.c.b16 %v94, %v93
    %v107 = vpack.c.b16 %v96, %v95
    %v108 = vpack.c.b16 %v98, %v97
    %v109 = vpack.c.b16 %v100, %v99
    %v110 = vpack.c.b16 %v102, %v101
    %v135 = vunpack.c.l.b16 %v55
    %v136 = vunpack.c.l.b16 %v56
    %v137 = vunpack.c.l.b16 %v57
    %v138 = vunpack.c.l.b16 %v58
    %v139 = vunpack.c.l.b16 %v59
    %v140 = vunpack.c.l.b16 %v60
    %v141 = vunpack.c.l.b16 %v61
    %v142 = vunpack.c.l.b16 %v62
    %v143 = vunpack.c.l.b16 %v63
    %v144 = vunpack.c.l.b16 %v64
    %v145 = vunpack.c.l.b16 %v65
    %v146 = vunpack.c.l.b16 %v66
    %v147 = vunpack.c.l.b16 %v67
    %v148 = vunpack.c.l.b16 %v68
    %v149 = vunpack.c.l.b16 %v69
    %v150 = vunpack.c.l.b16 %v70
    %v151 = vpack.c.b16 %v136, %v135
    %v152 = vpack.c.b16 %v138, %v137
    %v153 = vpack.c.b16 %v140, %v139
    %v154 = vpack.c.b16 %v142, %v141
    %v155 = vpack.c.b16 %v144, %v143
    %v156 = vpack.c.b16 %v146, %v145
    %v157 = vpack.c.b16 %v148, %v147
    %v158 = vpack.c.b16 %v150, %v149
    %167 = vmatprep.subr.bf16.mxu0 0
    %168 = vmatpush1.bf16.msra.mxu0 %v151
    %169 = vmatprep.subr.bf16.mxu0 0
    %170 = vmatpush1.bf16.msra.mxu0 %v152
    %171 = vmatprep.subr.bf16.mxu0 0
    %172 = vmatpush1.bf16.msra.mxu0 %v153
    %173 = vmatprep.subr.bf16.mxu0 0
    %174 = vmatpush1.bf16.msra.mxu0 %v154
    %175 = vmatprep.subr.bf16.mxu0 0
    %176 = vmatpush1.bf16.msra.mxu0 %v155
    %177 = vmatprep.subr.bf16.mxu0 0
    %178 = vmatpush1.bf16.msra.mxu0 %v156
    %179 = vmatprep.subr.bf16.mxu0 0
    %180 = vmatpush1.bf16.msra.mxu0 %v157
    %181 = vmatprep.subr.bf16.mxu0 0
    %182 = vmatpush1.bf16.msra.mxu0 %v158
    %183 = vmatprep.subr.bf16.mxu0 0
    %184 = vmatpush1.bf16.msra.mxu0 0
    %185 = vmatprep.subr.bf16.mxu0 0
    %186 = vmatpush1.bf16.msra.mxu0 0
    %187 = vmatprep.subr.bf16.mxu0 0
    %188 = vmatpush1.bf16.msra.mxu0 0
    %189 = vmatprep.subr.bf16.mxu0 0
    %190 = vmatpush1.bf16.msra.mxu0 0
    %191 = vmatprep.subr.bf16.mxu0 0
    %192 = vmatpush1.bf16.msra.mxu0 0
    %193 = vmatprep.subr.bf16.mxu0 0
    %194 = vmatpush1.bf16.msra.mxu0 0
    %195 = vmatprep.subr.bf16.mxu0 0
    %196 = vmatpush1.bf16.msra.mxu0 0
    %197 = vmatprep.subr.bf16.mxu0 0
    %198 = vmatpush1.bf16.msra.mxu0 0
    %199 = vmatprep.mubr.bf16.mxu0 0
    %200 = vmatmul.mubr.bf16.gmra.mrb[0].mxu0 %v103
    %v201 = vpop.f32.mrb[0].mxu0
    %v202 = vadd.f32 0.0, %v201
    %v203 = vpop.f32.mrb[0].mxu0
    %v204 = vpop.f32.mrb[0].mxu0
    %v205 = vadd.f32 0.0, %v204
    %v206 = vpop.f32.mrb[0].mxu0
    %207 = vmatprep.mubr.bf16.mxu0 0
    %208 = vmatmul.mubr.bf16.gmra.mrb[0].mxu0 %v104
    %v209 = vpop.f32.mrb[0].mxu0
    %v210 = vadd.f32 0.0, %v209
    %v211 = vpop.f32.mrb[0].mxu0
    %v212 = vpop.f32.mrb[0].mxu0
    %v213 = vadd.f32 0.0, %v212
    %v214 = vpop.f32.mrb[0].mxu0
    %215 = vmatprep.mubr.bf16.mxu0 0
    %216 = vmatmul.mubr.bf16.gmra.mrb[0].mxu0 %v105
    %v217 = vpop.f32.mrb[0].mxu0
    %v218 = vadd.f32 0.0, %v217
    %v219 = vpop.f32.mrb[0].mxu0
    %v220 = vpop.f32.mrb[0].mxu0
    %v221 = vadd.f32 0.0, %v220
    %v222 = vpop.f32.mrb[0].mxu0
    %223 = vmatprep.mubr.bf16.mxu0 0
    %224 = vmatmul.mubr.bf16.gmra.mrb[0].mxu0 %v106
    %v225 = vpop.f32.mrb[0].mxu0
    %v226 = vadd.f32 0.0, %v225
    %v227 = vpop.f32.mrb[0].mxu0
    %v228 = vpop.f32.mrb[0].mxu0
    %v229 = vadd.f32 0.0, %v228
    %v230 = vpop.f32.mrb[0].mxu0
    %231 = vmatprep.mubr.bf16.mxu0 0
    %232 = vmatmul.mubr.bf16.gmra.mrb[0].mxu0 %v107
    %v233 = vpop.f32.mrb[0].mxu0
    %v234 = vadd.f32 0.0, %v233
    %v235 = vpop.f32.mrb[0].mxu0
    %v236 = vpop.f32.mrb[0].mxu0
    %v237 = vadd.f32 0.0, %v236
    %v238 = vpop.f32.mrb[0].mxu0
    %239 = vmatprep.mubr.bf16.mxu0 0
    %240 = vmatmul.mubr.bf16.gmra.mrb[0].mxu0 %v108
    %v241 = vpop.f32.mrb[0].mxu0
    %v242 = vadd.f32 0.0, %v241
    %v243 = vpop.f32.mrb[0].mxu0
    %v244 = vpop.f32.mrb[0].mxu0
    %v245 = vadd.f32 0.0, %v244
    %v246 = vpop.f32.mrb[0].mxu0
    %247 = vmatprep.mubr.bf16.mxu0 0
    %248 = vmatmul.mubr.bf16.gmra.mrb[0].mxu0 %v109
    %v249 = vpop.f32.mrb[0].mxu0
    %v250 = vadd.f32 0.0, %v249
    %v251 = vpop.f32.mrb[0].mxu0
    %v252 = vpop.f32.mrb[0].mxu0
    %v253 = vadd.f32 0.0, %v252
    %v254 = vpop.f32.mrb[0].mxu0
    %255 = vmatprep.mubr.bf16.mxu0 0
    %256 = vmatmul.mubr.bf16.gmra.mrb[0].mxu0 %v110
    %v257 = vpop.f32.mrb[0].mxu0
    %v258 = vadd.f32 0.0, %v257
    %v259 = vpop.f32.mrb[0].mxu0
    %v260 = vpop.f32.mrb[0].mxu0
    %v261 = vadd.f32 0.0, %v260
    %v262 = vpop.f32.mrb[0].mxu0
    %263 = vdwg.mxu0
    %v264 = vpack.c.bf16 %v205, %v202
    %v265 = vpack.c.bf16 %v213, %v210
    %v266 = vpack.c.bf16 %v221, %v218
    %v267 = vpack.c.bf16 %v229, %v226
    %v268 = vpack.c.bf16 %v237, %v234
    %v269 = vpack.c.bf16 %v245, %v242
    %v270 = vpack.c.bf16 %v253, %v250
    %v271 = vpack.c.bf16 %v261, %v258
    %s272 = sshra.s32 %s24, 4
    %s273 = sand.u32 %s24, 15
    %s274 = smul.addr %s272, 8
    %s275 = scalar_lea.vmem [#allocation2], %s274
    %276 = vst [vmem:[%s275] sm:$0xff] %v264
    %277 = vst [vmem:[%s275 + $0x8] sm:$0xff] %v265
    %278 = vst [vmem:[%s275 + $0x10] sm:$0xff] %v266
    %279 = vst [vmem:[%s275 + $0x18] sm:$0xff] %v267
    %280 = vst [vmem:[%s275 + $0x20] sm:$0xff] %v268
    %281 = vst [vmem:[%s275 + $0x28] sm:$0xff] %v269
    %282 = vst [vmem:[%s275 + $0x30] sm:$0xff] %v270
    %283 = vst [vmem:[%s275 + $0x38] sm:$0xff] %v271
  $region33: #{graph_encoder_forward.3} parent=0 // pred_fallthru
    _
  // Predicated region
  $region34: #{graph_encoder_forward.3} parent=0 // pred_check
    %p284 = pneg %p26
  $region35: #{graph_encoder_forward.3} parent=0 // pred_check_branch
    %286 = sbr.rel (%p284) target = $region37
  $region36: #{graph_encoder_forward.3} parent=0 // pred_region
    %287 = vst [vmem:[#allocation3] sm:$0xff] 0.0
    %288 = vst [vmem:[#allocation3 + $0x8] sm:$0xff] 0.0
    %289 = vst [vmem:[#allocation3 + $0x10] sm:$0xff] 0.0
    %290 = vst [vmem:[#allocation3 + $0x18] sm:$0xff] 0.0
    %291 = vst [vmem:[#allocation3 + $0x20] sm:$0xff] 0.0
    %292 = vst [vmem:[#allocation3 + $0x28] sm:$0xff] 0.0
    %293 = vst [vmem:[#allocation3 + $0x30] sm:$0xff] 0.0
    %294 = vst [vmem:[#allocation3 + $0x38] sm:$0xff] 0.0
    %295 = vst [vmem:[#allocation3 + $0x40] sm:$0xff] 0.0
    %296 = vst [vmem:[#allocation3 + $0x48] sm:$0xff] 0.0
    %297 = vst [vmem:[#allocation3 + $0x50] sm:$0xff] 0.0
    %298 = vst [vmem:[#allocation3 + $0x58] sm:$0xff] 0.0
    %299 = vst [vmem:[#allocation3 + $0x60] sm:$0xff] 0.0
    %300 = vst [vmem:[#allocation3 + $0x68] sm:$0xff] 0.0
    %301 = vst [vmem:[#allocation3 + $0x70] sm:$0xff] 0.0
    %302 = vst [vmem:[#allocation3 + $0x78] sm:$0xff] 0.0
  $region37: #{graph_encoder_forward.3} parent=0 // pred_fallthru
    _
  %v303 = vld [vmem:[#allocation3] sm:$0xff]
  %v304 = vld [vmem:[#allocation3 + $0x8] sm:$0xff]
  %v305 = vld [vmem:[#allocation3 + $0x10] sm:$0xff]
  %v306 = vld [vmem:[#allocation3 + $0x18] sm:$0xff]
  %v307 = vld [vmem:[#allocation3 + $0x20] sm:$0xff]
  %v308 = vld [vmem:[#allocation3 + $0x28] sm:$0xff]
  %v309 = vld [vmem:[#allocation3 + $0x30] sm:$0xff]
  %v310 = vld [vmem:[#allocation3 + $0x38] sm:$0xff]
  %v311 = vld [vmem:[#allocation3 + $0x40] sm:$0xff]
  %v312 = vld [vmem:[#allocation3 + $0x48] sm:$0xff]
  %v313 = vld [vmem:[#allocation3 + $0x50] sm:$0xff]
  %v314 = vld [vmem:[#allocation3 + $0x58] sm:$0xff]
  %v315 = vld [vmem:[#allocation3 + $0x60] sm:$0xff]
  %v316 = vld [vmem:[#allocation3 + $0x68] sm:$0xff]
  %v317 = vld [vmem:[#allocation3 + $0x70] sm:$0xff]
  %v318 = vld [vmem:[#allocation3 + $0x78] sm:$0xff]
  %v319 = vld [vmem:[%s0] sm:$0xf]
  %v320 = vld [vmem:[%s0 + $0x4] sm:$0xf]
  %v321 = vld [vmem:[%s0 + $0x8] sm:$0xf]
  %v322 = vld [vmem:[%s0 + $0xc] sm:$0xf]
  %v323 = vld [vmem:[%s0 + $0x10] sm:$0xf]
  %v324 = vld [vmem:[%s0 + $0x14] sm:$0xf]
  %v325 = vld [vmem:[%s0 + $0x18] sm:$0xf]
  %v326 = vld [vmem:[%s0 + $0x1c] sm:$0xf]
  %v327 = vld [vmem:[%s0 + $0x20] sm:$0xf]
  %v328 = vld [vmem:[%s0 + $0x24] sm:$0xf]
  %v329 = vld [vmem:[%s0 + $0x28] sm:$0xf]
  %v330 = vld [vmem:[%s0 + $0x2c] sm:$0xf]
  %v331 = vld [vmem:[%s0 + $0x30] sm:$0xf]
  %v332 = vld [vmem:[%s0 + $0x34] sm:$0xf]
  %v333 = vld [vmem:[%s0 + $0x38] sm:$0xf]
  %v334 = vld [vmem:[%s0 + $0x3c] sm:$0xf]
  %s335 = sshra.s32 %s24, 4
  %s336 = sand.u32 %s24, 15
  %s337 = smul.addr %s335, 8
  %s338 = scalar_lea.vmem [#allocation2], %s337
  %v339 = vld [vmem:[%s338] sm:$0xff]
  %v340 = vld [vmem:[%s338 + $0x8] sm:$0xff]
  %v341 = vld [vmem:[%s338 + $0x10] sm:$0xff]
  %v342 = vld [vmem:[%s338 + $0x18] sm:$0xff]
  %v343 = vld [vmem:[%s338 + $0x20] sm:$0xff]
  %v344 = vld [vmem:[%s338 + $0x28] sm:$0xff]
  %v345 = vld [vmem:[%s338 + $0x30] sm:$0xff]
  %v346 = vld [vmem:[%s338 + $0x38] sm:$0xff]
  %v363 = vunpack.c.l.b16 %v319
  %v364 = vunpack.c.l.b16 %v320
  %v365 = vunpack.c.l.b16 %v321
  %v366 = vunpack.c.l.b16 %v322
  %v367 = vunpack.c.l.b16 %v323
  %v368 = vunpack.c.l.b16 %v324
  %v369 = vunpack.c.l.b16 %v325
  %v370 = vunpack.c.l.b16 %v326
  %v371 = vunpack.c.l.b16 %v327
  %v372 = vunpack.c.l.b16 %v328
  %v373 = vunpack.c.l.b16 %v329
  %v374 = vunpack.c.l.b16 %v330
  %v375 = vunpack.c.l.b16 %v331
  %v376 = vunpack.c.l.b16 %v332
  %v377 = vunpack.c.l.b16 %v333
  %v378 = vunpack.c.l.b16 %v334
  %v379 = vpack.c.b16 %v364, %v363
  %v380 = vpack.c.b16 %v366, %v365
  %v381 = vpack.c.b16 %v368, %v367
  %v382 = vpack.c.b16 %v370, %v369
  %v383 = vpack.c.b16 %v372, %v371
  %v384 = vpack.c.b16 %v374, %v373
  %v385 = vpack.c.b16 %v376, %v375
  %v386 = vpack.c.b16 %v378, %v377
  %395 = vmatprep.subr.bf16.mxu0 0
  %396 = vmatpush1.bf16.msra.mxu0 %v339
  %397 = vmatprep.subr.bf16.mxu0 0
  %398 = vmatpush1.bf16.msra.mxu0 %v340
  %399 = vmatprep.subr.bf16.mxu0 0
  %400 = vmatpush1.bf16.msra.mxu0 %v341
  %401 = vmatprep.subr.bf16.mxu0 0
  %402 = vmatpush1.bf16.msra.mxu0 %v342
  %403 = vmatprep.subr.bf16.mxu0 0
  %404 = vmatpush1.bf16.msra.mxu0 %v343
  %405 = vmatprep.subr.bf16.mxu0 0
  %406 = vmatpush1.bf16.msra.mxu0 %v344
  %407 = vmatprep.subr.bf16.mxu0 0
  %408 = vmatpush1.bf16.msra.mxu0 %v345
  %409 = vmatprep.subr.bf16.mxu0 0
  %410 = vmatpush1.bf16.msra.mxu0 %v346
  %411 = vmatprep.subr.bf16.mxu0 0
  %412 = vmatpush1.bf16.msra.mxu0 0
  %413 = vmatprep.subr.bf16.mxu0 0
  %414 = vmatpush1.bf16.msra.mxu0 0
  %415 = vmatprep.subr.bf16.mxu0 0
  %416 = vmatpush1.bf16.msra.mxu0 0
  %417 = vmatprep.subr.bf16.mxu0 0
  %418 = vmatpush1.bf16.msra.mxu0 0
  %419 = vmatprep.subr.bf16.mxu0 0
  %420 = vmatpush1.bf16.msra.mxu0 0
  %421 = vmatprep.subr.bf16.mxu0 0
  %422 = vmatpush1.bf16.msra.mxu0 0
  %423 = vmatprep.subr.bf16.mxu0 0
  %424 = vmatpush1.bf16.msra.mxu0 0
  %425 = vmatprep.subr.bf16.mxu0 0
  %426 = vmatpush1.bf16.msra.mxu0 0
  %427 = vmatprep.mubr.bf16.mxu0 0
  %428 = vmatmul.mubr.bf16.gmra.mrb[0].mxu0 %v379
  %v429 = vpop.f32.mrb[0].mxu0
  %v430 = vadd.f32 0.0, %v429
  %v431 = vpop.f32.mrb[0].mxu0
  %v432 = vpop.f32.mrb[0].mxu0
  %v433 = vadd.f32 0.0, %v432
  %v434 = vpop.f32.mrb[0].mxu0
  %435 = vmatprep.mubr.bf16.mxu0 0
  %436 = vmatmul.mubr.bf16.gmra.mrb[0].mxu0 %v380
  %v437 = vpop.f32.mrb[0].mxu0
  %v438 = vadd.f32 0.0, %v437
  %v439 = vpop.f32.mrb[0].mxu0
  %v440 = vpop.f32.mrb[0].mxu0
  %v441 = vadd.f32 0.0, %v440
  %v442 = vpop.f32.mrb[0].mxu0
  %443 = vmatprep.mubr.bf16.mxu0 0
  %444 = vmatmul.mubr.bf16.gmra.mrb[0].mxu0 %v381
  %v445 = vpop.f32.mrb[0].mxu0
  %v446 = vadd.f32 0.0, %v445
  %v447 = vpop.f32.mrb[0].mxu0
  %v448 = vpop.f32.mrb[0].mxu0
  %v449 = vadd.f32 0.0, %v448
  %v450 = vpop.f32.mrb[0].mxu0
  %451 = vmatprep.mubr.bf16.mxu0 0
  %452 = vmatmul.mubr.bf16.gmra.mrb[0].mxu0 %v382
  %v453 = vpop.f32.mrb[0].mxu0
  %v454 = vadd.f32 0.0, %v453
  %v455 = vpop.f32.mrb[0].mxu0
  %v456 = vpop.f32.mrb[0].mxu0
  %v457 = vadd.f32 0.0, %v456
  %v458 = vpop.f32.mrb[0].mxu0
  %459 = vmatprep.mubr.bf16.mxu0 0
  %460 = vmatmul.mubr.bf16.gmra.mrb[0].mxu0 %v383
  %v461 = vpop.f32.mrb[0].mxu0
  %v462 = vadd.f32 0.0, %v461
  %v463 = vpop.f32.mrb[0].mxu0
  %v464 = vpop.f32.mrb[0].mxu0
  %v465 = vadd.f32 0.0, %v464
  %v466 = vpop.f32.mrb[0].mxu0
  %467 = vmatprep.mubr.bf16.mxu0 0
  %468 = vmatmul.mubr.bf16.gmra.mrb[0].mxu0 %v384
  %v469 = vpop.f32.mrb[0].mxu0
  %v470 = vadd.f32 0.0, %v469
  %v471 = vpop.f32.mrb[0].mxu0
  %v472 = vpop.f32.mrb[0].mxu0
  %v473 = vadd.f32 0.0, %v472
  %v474 = vpop.f32.mrb[0].mxu0
  %475 = vmatprep.mubr.bf16.mxu0 0
  %476 = vmatmul.mubr.bf16.gmra.mrb[0].mxu0 %v385
  %v477 = vpop.f32.mrb[0].mxu0
  %v478 = vadd.f32 0.0, %v477
  %v479 = vpop.f32.mrb[0].mxu0
  %v480 = vpop.f32.mrb[0].mxu0
  %v481 = vadd.f32 0.0, %v480
  %v482 = vpop.f32.mrb[0].mxu0
  %483 = vmatprep.mubr.bf16.mxu0 0
  %484 = vmatmul.mubr.bf16.gmra.mrb[0].mxu0 %v386
  %v485 = vpop.f32.mrb[0].mxu0
  %v486 = vadd.f32 0.0, %v485
  %v487 = vpop.f32.mrb[0].mxu0
  %v488 = vpop.f32.mrb[0].mxu0
  %v489 = vadd.f32 0.0, %v488
  %v490 = vpop.f32.mrb[0].mxu0
  %491 = vdwg.mxu0
  %v492 = vadd.f32 %v303, %v430
  %v493 = vadd.f32 %v304, %v433
  %v494 = vadd.f32 %v305, %v438
  %v495 = vadd.f32 %v306, %v441
  %v496 = vadd.f32 %v307, %v446
  %v497 = vadd.f32 %v308, %v449
  %v498 = vadd.f32 %v309, %v454
  %v499 = vadd.f32 %v310, %v457
  %v500 = vadd.f32 %v311, %v462
  %v501 = vadd.f32 %v312, %v465
  %v502 = vadd.f32 %v313, %v470
  %v503 = vadd.f32 %v314, %v473
  %v504 = vadd.f32 %v315, %v478
  %v505 = vadd.f32 %v316, %v481
  %v506 = vadd.f32 %v317, %v486
  %v507 = vadd.f32 %v318, %v489
  %508 = vst [vmem:[#allocation3] sm:$0xff] %v492
  %509 = vst [vmem:[#allocation3 + $0x8] sm:$0xff] %v493
  %510 = vst [vmem:[#allocation3 + $0x10] sm:$0xff] %v494
  %511 = vst [vmem:[#allocation3 + $0x18] sm:$0xff] %v495
  %512 = vst [vmem:[#allocation3 + $0x20] sm:$0xff] %v496
  %513 = vst [vmem:[#allocation3 + $0x28] sm:$0xff] %v497
  %514 = vst [vmem:[#allocation3 + $0x30] sm:$0xff] %v498
  %515 = vst [vmem:[#allocation3 + $0x38] sm:$0xff] %v499
  %516 = vst [vmem:[#allocation3 + $0x40] sm:$0xff] %v500
  %517 = vst [vmem:[#allocation3 + $0x48] sm:$0xff] %v501
  %518 = vst [vmem:[#allocation3 + $0x50] sm:$0xff] %v502
  %519 = vst [vmem:[#allocation3 + $0x58] sm:$0xff] %v503
  %520 = vst [vmem:[#allocation3 + $0x60] sm:$0xff] %v504
  %521 = vst [vmem:[#allocation3 + $0x68] sm:$0xff] %v505
  %522 = vst [vmem:[#allocation3 + $0x70] sm:$0xff] %v506
  %523 = vst [vmem:[#allocation3 + $0x78] sm:$0xff] %v507
  // Predicated region
  $region38: #{graph_encoder_forward.3} parent=0 // pred_check
    %p524 = pneg %p26
  $region39: #{graph_encoder_forward.3} parent=0 // pred_check_branch
    %526 = sbr.rel (%p524) target = $region41
  $region40: #{graph_encoder_forward.3} parent=0 // pred_region
    %v527 = vld [vmem:[#allocation3] sm:$0xff]
    %v528 = vld [vmem:[#allocation3 + $0x8] sm:$0xff]
    %v529 = vld [vmem:[#allocation3 + $0x10] sm:$0xff]
    %v530 = vld [vmem:[#allocation3 + $0x18] sm:$0xff]
    %v531 = vld [vmem:[#allocation3 + $0x20] sm:$0xff]
    %v532 = vld [vmem:[#allocation3 + $0x28] sm:$0xff]
    %v533 = vld [vmem:[#allocation3 + $0x30] sm:$0xff]
    %v534 = vld [vmem:[#allocation3 + $0x38] sm:$0xff]
    %v535 = vld [vmem:[#allocation3 + $0x40] sm:$0xff]
    %v536 = vld [vmem:[#allocation3 + $0x48] sm:$0xff]
    %v537 = vld [vmem:[#allocation3 + $0x50] sm:$0xff]
    %v538 = vld [vmem:[#allocation3 + $0x58] sm:$0xff]
    %v539 = vld [vmem:[#allocation3 + $0x60] sm:$0xff]
    %v540 = vld [vmem:[#allocation3 + $0x68] sm:$0xff]
    %v541 = vld [vmem:[#allocation3 + $0x70] sm:$0xff]
    %v542 = vld [vmem:[#allocation3 + $0x78] sm:$0xff]
    %v543 = vld [vmem:[%s3] sm:$0x1]
    %v545 = vlaneseq
    %v546 = vshrl.u32 %v545, 7
    %v547 = vsub.s32 0, %v546
    %v548 = vrot.slane %v543, %v547
    %v550 = vadd.f32 %v527, %v548
    %v551 = vadd.f32 %v528, %v548
    %v552 = vadd.f32 %v529, %v548
    %v553 = vadd.f32 %v530, %v548
    %v554 = vadd.f32 %v531, %v548
    %v555 = vadd.f32 %v532, %v548
    %v556 = vadd.f32 %v533, %v548
    %v557 = vadd.f32 %v534, %v548
    %v558 = vadd.f32 %v535, %v548
    %v559 = vadd.f32 %v536, %v548
    %v560 = vadd.f32 %v537, %v548
    %v561 = vadd.f32 %v538, %v548
    %v562 = vadd.f32 %v539, %v548
    %v563 = vadd.f32 %v540, %v548
    %v564 = vadd.f32 %v541, %v548
    %v565 = vadd.f32 %v542, %v548
    %v566 = vmax.f32 %v550, 0.0
    %v567 = vmax.f32 %v551, 0.0
    %v568 = vmax.f32 %v552, 0.0
    %v569 = vmax.f32 %v553, 0.0
    %v570 = vmax.f32 %v554, 0.0
    %v571 = vmax.f32 %v555, 0.0
    %v572 = vmax.f32 %v556, 0.0
    %v573 = vmax.f32 %v557, 0.0
    %v574 = vmax.f32 %v558, 0.0
    %v575 = vmax.f32 %v559, 0.0
    %v576 = vmax.f32 %v560, 0.0
    %v577 = vmax.f32 %v561, 0.0
    %v578 = vmax.f32 %v562, 0.0
    %v579 = vmax.f32 %v563, 0.0
    %v580 = vmax.f32 %v564, 0.0
    %v581 = vmax.f32 %v565, 0.0
    %v582 = vlaneseq
    %v583 = vshrl.u32 %v582, 7
    %v584 = vadd.s32 %v583, 8
    %v585 = vadd.s32 %v583, 16
    %v586 = vadd.s32 %v583, 24
    %v587 = vadd.s32 %v583, 32
    %v588 = vadd.s32 %v583, 40
    %v589 = vadd.s32 %v583, 48
    %v590 = vadd.s32 %v583, 56
    %v591 = vadd.s32 %v583, 64
    %v592 = vadd.s32 %v583, 72
    %v593 = vadd.s32 %v583, 80
    %v594 = vadd.s32 %v583, 88
    %v595 = vadd.s32 %v583, 96
    %v596 = vadd.s32 %v583, 104
    %v597 = vadd.s32 %v583, 112
    %v598 = vadd.s32 %v583, 120
    %s599 = smul.u32 0, 128
    %v600 = vstv %s599
    %v601 = vadd.s32 %v583, %v600
    %v602 = vadd.s32 %v584, %v600
    %v603 = vadd.s32 %v585, %v600
    %v604 = vadd.s32 %v586, %v600
    %v605 = vadd.s32 %v587, %v600
    %v606 = vadd.s32 %v588, %v600
    %v607 = vadd.s32 %v589, %v600
    %v608 = vadd.s32 %v590, %v600
    %v609 = vadd.s32 %v591, %v600
    %v610 = vadd.s32 %v592, %v600
    %v611 = vadd.s32 %v593, %v600
    %v612 = vadd.s32 %v594, %v600
    %v613 = vadd.s32 %v595, %v600
    %v614 = vadd.s32 %v596, %v600
    %v615 = vadd.s32 %v597, %v600
    %v616 = vadd.s32 %v598, %v600
    %vm617 = vcmp.lt.s32.totalorder %v601, 16
    %vm618 = vcmp.lt.s32.totalorder %v602, 16
    %vm619 = vcmp.lt.s32.totalorder %v603, 16
    %vm620 = vcmp.lt.s32.totalorder %v604, 16
    %vm621 = vcmp.lt.s32.totalorder %v605, 16
    %vm622 = vcmp.lt.s32.totalorder %v606, 16
    %vm623 = vcmp.lt.s32.totalorder %v607, 16
    %vm624 = vcmp.lt.s32.totalorder %v608, 16
    %vm625 = vcmp.lt.s32.totalorder %v609, 16
    %vm626 = vcmp.lt.s32.totalorder %v610, 16
    %vm627 = vcmp.lt.s32.totalorder %v611, 16
    %vm628 = vcmp.lt.s32.totalorder %v612, 16
    %vm629 = vcmp.lt.s32.totalorder %v613, 16
    %vm630 = vcmp.lt.s32.totalorder %v614, 16
    %vm631 = vcmp.lt.s32.totalorder %v615, 16
    %vm632 = vcmp.lt.s32.totalorder %v616, 16
    %v633 = vsel %vm617, %v566, 0.0
    %v634 = vsel %vm618, %v567, 0.0
    %v635 = vsel %vm619, %v568, 0.0
    %v636 = vsel %vm620, %v569, 0.0
    %v637 = vsel %vm621, %v570, 0.0
    %v638 = vsel %vm622, %v571, 0.0
    %v639 = vsel %vm623, %v572, 0.0
    %v640 = vsel %vm624, %v573, 0.0
    %v641 = vsel %vm625, %v574, 0.0
    %v642 = vsel %vm626, %v575, 0.0
    %v643 = vsel %vm627, %v576, 0.0
    %v644 = vsel %vm628, %v577, 0.0
    %v645 = vsel %vm629, %v578, 0.0
    %v646 = vsel %vm630, %v579, 0.0
    %v647 = vsel %vm631, %v580, 0.0
    %v648 = vsel %vm632, %v581, 0.0
    %v649 = vld [vmem:[#allocation4] sm:$0x1]
    %v650 = vadd.f32 %v633, %v634
    %v651 = vadd.f32 %v650, %v635
    %v652 = vadd.f32 %v651, %v636
    %v653 = vadd.f32 %v652, %v637
    %v654 = vadd.f32 %v653, %v638
    %v655 = vadd.f32 %v654, %v639
    %v656 = vadd.f32 %v655, %v640
    %v657 = vadd.f32 %v656, %v641
    %v658 = vadd.f32 %v657, %v642
    %v659 = vadd.f32 %v658, %v643
    %v660 = vadd.f32 %v659, %v644
    %v661 = vadd.f32 %v660, %v645
    %v662 = vadd.f32 %v661, %v646
    %v663 = vadd.f32 %v662, %v647
    %v664 = vadd.f32 %v663, %v648
    %v665 = vrot.slane %v664, 4
    %v666 = vadd.f32 %v664, %v665
    %v667 = vrot.slane %v666, 2
    %v668 = vadd.f32 %v666, %v667
    %v669 = vrot.slane %v668, 1
    %v670 = vadd.f32 %v668, %v669
    %v671 = vadd.f32 %v649, %v670
    %672 = vst [vmem:[#allocation4] sm:$0x1] %v671
  $region41: #{graph_encoder_forward.3} parent=0 // pred_fallthru
    _
  // Predicated region
  $region42: #{graph_encoder_forward.3} parent=0 // pred_check
    _
  $region43: #{graph_encoder_forward.3} parent=0 // pred_check_branch
    %674 = sbr.rel (%p27) target = $region45
  $region44: #{graph_encoder_forward.3} parent=0 // pred_region
    %v675 = vld [vmem:[#allocation4] sm:$0x1]
    %v676 = vmul.f32 %v675, 0.0625
    %v677 = vld [vmem:[%s4] sm:$0xff]
    %v678 = vld [vmem:[%s4 + $0x8] sm:$0xff]
    %v679 = vld [vmem:[%s4 + $0x10] sm:$0xff]
    %v680 = vld [vmem:[%s4 + $0x18] sm:$0xff]
    %v681 = vld [vmem:[%s4 + $0x20] sm:$0xff]
    %v682 = vld [vmem:[%s4 + $0x28] sm:$0xff]
    %v683 = vld [vmem:[%s4 + $0x30] sm:$0xff]
    %v684 = vld [vmem:[%s4 + $0x38] sm:$0xff]
    %v685 = vld [vmem:[%s4 + $0x40] sm:$0xff]
    %v686 = vld [vmem:[%s4 + $0x48] sm:$0xff]
    %v687 = vld [vmem:[%s4 + $0x50] sm:$0xff]
    %v688 = vld [vmem:[%s4 + $0x58] sm:$0xff]
    %v689 = vld [vmem:[%s4 + $0x60] sm:$0xff]
    %v690 = vld [vmem:[%s4 + $0x68] sm:$0xff]
    %v691 = vld [vmem:[%s4 + $0x70] sm:$0xff]
    %v692 = vld [vmem:[%s4 + $0x78] sm:$0xff]
    %v693 = vld [vmem:[%s5] sm:$0x1]
    %694 = vmatprep.subr.mxu0 0.0
    %695 = vmatpush1.msra.mxu0 %v677
    %696 = vmatprep.subr.mxu0 0.0
    %697 = vmatpush1.msra.mxu0 %v678
    %698 = vmatprep.subr.mxu0 0.0
    %699 = vmatpush1.msra.mxu0 %v679
    %700 = vmatprep.subr.mxu0 0.0
    %701 = vmatpush1.msra.mxu0 %v680
    %702 = vmatprep.subr.mxu0 0.0
    %703 = vmatpush1.msra.mxu0 %v681
    %704 = vmatprep.subr.mxu0 0.0
    %705 = vmatpush1.msra.mxu0 %v682
    %706 = vmatprep.subr.mxu0 0.0
    %707 = vmatpush1.msra.mxu0 %v683
    %708 = vmatprep.subr.mxu0 0.0
    %709 = vmatpush1.msra.mxu0 %v684
    %710 = vmatprep.subr.mxu0 0.0
    %711 = vmatpush1.msra.mxu0 %v685
    %712 = vmatprep.subr.mxu0 0.0
    %713 = vmatpush1.msra.mxu0 %v686
    %714 = vmatprep.subr.mxu0 0.0
    %715 = vmatpush1.msra.mxu0 %v687
    %716 = vmatprep.subr.mxu0 0.0
    %717 = vmatpush1.msra.mxu0 %v688
    %718 = vmatprep.subr.mxu0 0.0
    %719 = vmatpush1.msra.mxu0 %v689
    %720 = vmatprep.subr.mxu0 0.0
    %721 = vmatpush1.msra.mxu0 %v690
    %722 = vmatprep.subr.mxu0 0.0
    %723 = vmatpush1.msra.mxu0 %v691
    %724 = vmatprep.subr.mxu0 0.0
    %725 = vmatpush1.msra.mxu0 %v692
    %726 = vmatprep.subr.mxu0 0.0
    %727 = vmatpush1.msra.mxu0 0.0
    %728 = vmatprep.subr.mxu0 0.0
    %729 = vmatpush1.msra.mxu0 0.0
    %730 = vmatprep.subr.mxu0 0.0
    %731 = vmatpush1.msra.mxu0 0.0
    %732 = vmatprep.subr.mxu0 0.0
    %733 = vmatpush1.msra.mxu0 0.0
    %734 = vmatprep.subr.mxu0 0.0
    %735 = vmatpush1.msra.mxu0 0.0
    %736 = vmatprep.subr.mxu0 0.0
    %737 = vmatpush1.msra.mxu0 0.0
    %738 = vmatprep.subr.mxu0 0.0
    %739 = vmatpush1.msra.mxu0 0.0
    %740 = vmatprep.subr.mxu0 0.0
    %741 = vmatpush1.msra.mxu0 0.0
    %742 = vmatprep.subr.mxu0 0.0
    %743 = vmatpush1.msra.mxu0 0.0
    %744 = vmatprep.subr.mxu0 0.0
    %745 = vmatpush1.msra.mxu0 0.0
    %746 = vmatprep.subr.mxu0 0.0
    %747 = vmatpush1.msra.mxu0 0.0
    %748 = vmatprep.subr.mxu0 0.0
    %749 = vmatpush1.msra.mxu0 0.0
    %750 = vmatprep.subr.mxu0 0.0
    %751 = vmatpush1.msra.mxu0 0.0
    %752 = vmatprep.subr.mxu0 0.0
    %753 = vmatpush1.msra.mxu0 0.0
    %754 = vmatprep.subr.mxu0 0.0
    %755 = vmatpush1.msra.mxu0 0.0
    %756 = vmatprep.subr.mxu0 0.0
    %757 = vmatpush1.msra.mxu0 0.0
    %758 = vmatprep.mubr.f32.mxu0 0.0
    %759 = vmatmul.mubr.f32.gmra.mrb[0].mxu0 %v676
    %v760 = vpop.f32.mrb[0].mxu0
    %v761 = vadd.f32 %v693, %v760
    %v762 = vpop.f32.mrb[0].mxu0
    %763 = vdwg.mxu0
    %764 = vst [vmem:[%s6] sm:$0x1] %v761
  $region45: #{graph_encoder_forward.3} parent=0 // pred_fallthru
    _
  // Predicated region
  $region46: #{graph_encoder_forward.3} parent=0 // pred_check
    _
  $region47: #{graph_encoder_forward.3} parent=0 // pred_check_branch
    %766 = sbr.rel (0) target = $region49
  $region48: #{graph_encoder_forward.3} parent=0 // pred_region
    _
  $region49: #{graph_encoder_forward.3} parent=0 // pred_fallthru
    _
  // Predicated region
  $region50: #{graph_encoder_forward.3} parent=0 // pred_check
    _
  $region51: #{graph_encoder_forward.3} parent=0 // pred_check_branch
    %768 = sbr.rel (0) target = $region53
  $region52: #{graph_encoder_forward.3} parent=0 // pred_region
    _
  $region53: #{graph_encoder_forward.3} parent=0 // pred_fallthru
    _

// kernel: graph_encoder_forward.2
$region0: #{graph_encoder_forward.2}
  #allocation0 [shape = 'u32[]', space=smem, size = 0x4, offset = 0x4, fixed_abs, tag = 'smem constant byte address 0x4 - core index']
  #allocation1 [shape = 'u32[144,128]{1,0:T(1,128)}', space=vmem, size = 0x12000, scoped, tag = 'internal scratch']
  #allocation2 [shape = 'bf16[128,128]{1,0:T(16,128)(2,1)}', space=vmem, size = 0x8000, scoped, tag = 'scratch operand']
  #allocation3 [shape = 'f32[128,128]{1,0:T(8,128)}', space=vmem, size = 0x10000, scoped, tag = 'scratch operand']
  %s0 = inlined_call_operand.vmem [shape: bf16[128,128], index: 0, kind: input, shape index: {}]
  %s1 = inlined_call_operand.vmem [shape: bf16[128,128], index: 1, kind: input, shape index: {}]
  %s2 = inlined_call_operand.vmem [shape: bf16[128,128], index: 2, kind: input, shape index: {}]
  %s3 = inlined_call_operand.vmem [shape: f32[1,128], index: 3, kind: input, shape index: {}]
  %s4 = inlined_call_operand.vmem [shape: bf16[128,128], index: 4, kind: output, shape index: {}]
  %s5 = sld [smem:[#allocation0]]
  $region38: #{graph_encoder_forward.2} parent=0
    _
  %s7 = ssub.s32 1, %s5
  %s8 = scalar_select 0, %s7, %s5
  // Predicated region
  $region2: #{graph_encoder_forward.2} parent=0 // pred_check
    _
  $region3: #{graph_encoder_forward.2} parent=0 // pred_check_branch
    %10 = sbr.rel (0) target = $region5
  $region4: #{graph_encoder_forward.2} parent=0 // pred_region
    _
  $region5: #{graph_encoder_forward.2} parent=0 // pred_fallthru
    _
  // Predicated region
  $region6: #{graph_encoder_forward.2} parent=0 // pred_check
    _
  $region7: #{graph_encoder_forward.2} parent=0 // pred_check_branch
    %12 = sbr.rel (0) target = $region9
  $region8: #{graph_encoder_forward.2} parent=0 // pred_region
    _
  $region9: #{graph_encoder_forward.2} parent=0 // pred_fallthru
    _
  // Predicated region
  $region10: #{graph_encoder_forward.2} parent=0 // pred_check
    _
  $region11: #{graph_encoder_forward.2} parent=0 // pred_check_branch
    %14 = sbr.rel (0) target = $region13
  $region12: #{graph_encoder_forward.2} parent=0 // pred_region
    _
  $region13: #{graph_encoder_forward.2} parent=0 // pred_fallthru
    _
  // Predicated region
  $region14: #{graph_encoder_forward.2} parent=0 // pred_check
    _
  $region15: #{graph_encoder_forward.2} parent=0 // pred_check_branch
    %16 = sbr.rel (0) target = $region17
  $region16: #{graph_encoder_forward.2} parent=0 // pred_region
    _
  $region17: #{graph_encoder_forward.2} parent=0 // pred_fallthru
    _
  %s18 = smul.u32 0, 128
  %p19 = scmp.eq.s32.totalorder 0, 0
  // Predicated region
  $region18: #{graph_encoder_forward.2} parent=0 // pred_check
    %p20 = pneg %p19
  $region19: #{graph_encoder_forward.2} parent=0 // pred_check_branch
    %22 = sbr.rel (%p20) target = $region21
  $region20: #{graph_encoder_forward.2} parent=0 // pred_region
    %s23 = sshra.s32 %s18, 3
    %s24 = sand.u32 %s18, 7
    %s25 = smul.addr %s23, 4
    %s26 = scalar_lea.vmem %s1, %s25
    %v27 = vld [vmem:[%s26] sm:$0xf]
    %v28 = vld [vmem:[%s26 + $0x4] sm:$0xf]
    %v29 = vld [vmem:[%s26 + $0x8] sm:$0xf]
    %v30 = vld [vmem:[%s26 + $0xc] sm:$0xf]
    %v31 = vld [vmem:[%s26 + $0x10] sm:$0xf]
    %v32 = vld [vmem:[%s26 + $0x14] sm:$0xf]
    %v33 = vld [vmem:[%s26 + $0x18] sm:$0xf]
    %v34 = vld [vmem:[%s26 + $0x1c] sm:$0xf]
    %v35 = vld [vmem:[%s26 + $0x20] sm:$0xf]
    %v36 = vld [vmem:[%s26 + $0x24] sm:$0xf]
    %v37 = vld [vmem:[%s26 + $0x28] sm:$0xf]
    %v38 = vld [vmem:[%s26 + $0x2c] sm:$0xf]
    %v39 = vld [vmem:[%s26 + $0x30] sm:$0xf]
    %v40 = vld [vmem:[%s26 + $0x34] sm:$0xf]
    %v41 = vld [vmem:[%s26 + $0x38] sm:$0xf]
    %v42 = vld [vmem:[%s26 + $0x3c] sm:$0xf]
    %v43 = vld [vmem:[%s2] sm:$0xf]
    %v44 = vld [vmem:[%s2 + $0x4] sm:$0xf]
    %v45 = vld [vmem:[%s2 + $0x8] sm:$0xf]
    %v46 = vld [vmem:[%s2 + $0xc] sm:$0xf]
    %v47 = vld [vmem:[%s2 + $0x10] sm:$0xf]
    %v48 = vld [vmem:[%s2 + $0x14] sm:$0xf]
    %v49 = vld [vmem:[%s2 + $0x18] sm:$0xf]
    %v50 = vld [vmem:[%s2 + $0x1c] sm:$0xf]
    %v51 = vld [vmem:[%s2 + $0x20] sm:$0xf]
    %v52 = vld [vmem:[%s2 + $0x24] sm:$0xf]
    %v53 = vld [vmem:[%s2 + $0x28] sm:$0xf]
    %v54 = vld [vmem:[%s2 + $0x2c] sm:$0xf]
    %v55 = vld [vmem:[%s2 + $0x30] sm:$0xf]
    %v56 = vld [vmem:[%s2 + $0x34] sm:$0xf]
    %v57 = vld [vmem:[%s2 + $0x38] sm:$0xf]
    %v58 = vld [vmem:[%s2 + $0x3c] sm:$0xf]
    %v75 = vunpack.c.l.b16 %v27
    %v76 = vunpack.c.l.b16 %v28
    %v77 = vunpack.c.l.b16 %v29
    %v78 = vunpack.c.l.b16 %v30
    %v79 = vunpack.c.l.b16 %v31
    %v80 = vunpack.c.l.b16 %v32
    %v81 = vunpack.c.l.b16 %v33
    %v82 = vunpack.c.l.b16 %v34
    %v83 = vunpack.c.l.b16 %v35
    %v84 = vunpack.c.l.b16 %v36
    %v85 = vunpack.c.l.b16 %v37
    %v86 = vunpack.c.l.b16 %v38
    %v87 = vunpack.c.l.b16 %v39
    %v88 = vunpack.c.l.b16 %v40
    %v89 = vunpack.c.l.b16 %v41
    %v90 = vunpack.c.l.b16 %v42
    %v91 = vpack.c.b16 %v76, %v75
    %v92 = vpack.c.b16 %v78, %v77
    %v93 = vpack.c.b16 %v80, %v79
    %v94 = vpack.c.b16 %v82, %v81
    %v95 = vpack.c.b16 %v84, %v83
    %v96 = vpack.c.b16 %v86, %v85
    %v97 = vpack.c.b16 %v88, %v87
    %v98 = vpack.c.b16 %v90, %v89
    %v123 = vunpack.c.l.b16 %v43
    %v124 = vunpack.c.l.b16 %v44
    %v125 = vunpack.c.l.b16 %v45
    %v126 = vunpack.c.l.b16 %v46
    %v127 = vunpack.c.l.b16 %v47
    %v128 = vunpack.c.l.b16 %v48
    %v129 = vunpack.c.l.b16 %v49
    %v130 = vunpack.c.l.b16 %v50
    %v131 = vunpack.c.l.b16 %v51
    %v132 = vunpack.c.l.b16 %v52
    %v133 = vunpack.c.l.b16 %v53
    %v134 = vunpack.c.l.b16 %v54
    %v135 = vunpack.c.l.b16 %v55
    %v136 = vunpack.c.l.b16 %v56
    %v137 = vunpack.c.l.b16 %v57
    %v138 = vunpack.c.l.b16 %v58
    %v139 = vpack.c.b16 %v124, %v123
    %v140 = vpack.c.b16 %v126, %v125
    %v141 = vpack.c.b16 %v128, %v127
    %v142 = vpack.c.b16 %v130, %v129
    %v143 = vpack.c.b16 %v132, %v131
    %v144 = vpack.c.b16 %v134, %v133
    %v145 = vpack.c.b16 %v136, %v135
    %v146 = vpack.c.b16 %v138, %v137
    %155 = vmatprep.subr.bf16.mxu0 0
    %156 = vmatpush1.bf16.msra.mxu0 %v139
    %157 = vmatprep.subr.bf16.mxu0 0
    %158 = vmatpush1.bf16.msra.mxu0 %v140
    %159 = vmatprep.subr.bf16.mxu0 0
    %160 = vmatpush1.bf16.msra.mxu0 %v141
    %161 = vmatprep.subr.bf16.mxu0 0
    %162 = vmatpush1.bf16.msra.mxu0 %v142
    %163 = vmatprep.subr.bf16.mxu0 0
    %164 = vmatpush1.bf16.msra.mxu0 %v143
    %165 = vmatprep.subr.bf16.mxu0 0
    %166 = vmatpush1.bf16.msra.mxu0 %v144
    %167 = vmatprep.subr.bf16.mxu0 0
    %168 = vmatpush1.bf16.msra.mxu0 %v145
    %169 = vmatprep.subr.bf16.mxu0 0
    %170 = vmatpush1.bf16.msra.mxu0 %v146
    %171 = vmatprep.subr.bf16.mxu0 0
    %172 = vmatpush1.bf16.msra.mxu0 0
    %173 = vmatprep.subr.bf16.mxu0 0
    %174 = vmatpush1.bf16.msra.mxu0 0
    %175 = vmatprep.subr.bf16.mxu0 0
    %176 = vmatpush1.bf16.msra.mxu0 0
    %177 = vmatprep.subr.bf16.mxu0 0
    %178 = vmatpush1.bf16.msra.mxu0 0
    %179 = vmatprep.subr.bf16.mxu0 0
    %180 = vmatpush1.bf16.msra.mxu0 0
    %181 = vmatprep.subr.bf16.mxu0 0
    %182 = vmatpush1.bf16.msra.mxu0 0
    %183 = vmatprep.subr.bf16.mxu0 0
    %184 = vmatpush1.bf16.msra.mxu0 0
    %185 = vmatprep.subr.bf16.mxu0 0
    %186 = vmatpush1.bf16.msra.mxu0 0
    %187 = vmatprep.mubr.bf16.mxu0 0
    %188 = vmatmul.mubr.bf16.gmra.mrb[0].mxu0 %v91
    %v189 = vpop.f32.mrb[0].mxu0
    %v190 = vadd.f32 0.0, %v189
    %v191 = vpop.f32.mrb[0].mxu0
    %v192 = vpop.f32.mrb[0].mxu0
    %v193 = vadd.f32 0.0, %v192
    %v194 = vpop.f32.mrb[0].mxu0
    %195 = vmatprep.mubr.bf16.mxu0 0
    %196 = vmatmul.mubr.bf16.gmra.mrb[0].mxu0 %v92
    %v197 = vpop.f32.mrb[0].mxu0
    %v198 = vadd.f32 0.0, %v197
    %v199 = vpop.f32.mrb[0].mxu0
    %v200 = vpop.f32.mrb[0].mxu0
    %v201 = vadd.f32 0.0, %v200
    %v202 = vpop.f32.mrb[0].mxu0
    %203 = vmatprep.mubr.bf16.mxu0 0
    %204 = vmatmul.mubr.bf16.gmra.mrb[0].mxu0 %v93
    %v205 = vpop.f32.mrb[0].mxu0
    %v206 = vadd.f32 0.0, %v205
    %v207 = vpop.f32.mrb[0].mxu0
    %v208 = vpop.f32.mrb[0].mxu0
    %v209 = vadd.f32 0.0, %v208
    %v210 = vpop.f32.mrb[0].mxu0
    %211 = vmatprep.mubr.bf16.mxu0 0
    %212 = vmatmul.mubr.bf16.gmra.mrb[0].mxu0 %v94
    %v213 = vpop.f32.mrb[0].mxu0
    %v214 = vadd.f32 0.0, %v213
    %v215 = vpop.f32.mrb[0].mxu0
    %v216 = vpop.f32.mrb[0].mxu0
    %v217 = vadd.f32 0.0, %v216
    %v218 = vpop.f32.mrb[0].mxu0
    %219 = vmatprep.mubr.bf16.mxu0 0
    %220 = vmatmul.mubr.bf16.gmra.mrb[0].mxu0 %v95
    %v221 = vpop.f32.mrb[0].mxu0
    %v222 = vadd.f32 0.0, %v221
    %v223 = vpop.f32.mrb[0].mxu0
    %v224 = vpop.f32.mrb[0].mxu0
    %v225 = vadd.f32 0.0, %v224
    %v226 = vpop.f32.mrb[0].mxu0
    %227 = vmatprep.mubr.bf16.mxu0 0
    %228 = vmatmul.mubr.bf16.gmra.mrb[0].mxu0 %v96
    %v229 = vpop.f32.mrb[0].mxu0
    %v230 = vadd.f32 0.0, %v229
    %v231 = vpop.f32.mrb[0].mxu0
    %v232 = vpop.f32.mrb[0].mxu0
    %v233 = vadd.f32 0.0, %v232
    %v234 = vpop.f32.mrb[0].mxu0
    %235 = vmatprep.mubr.bf16.mxu0 0
    %236 = vmatmul.mubr.bf16.gmra.mrb[0].mxu0 %v97
    %v237 = vpop.f32.mrb[0].mxu0
    %v238 = vadd.f32 0.0, %v237
    %v239 = vpop.f32.mrb[0].mxu0
    %v240 = vpop.f32.mrb[0].mxu0
    %v241 = vadd.f32 0.0, %v240
    %v242 = vpop.f32.mrb[0].mxu0
    %243 = vmatprep.mubr.bf16.mxu0 0
    %244 = vmatmul.mubr.bf16.gmra.mrb[0].mxu0 %v98
    %v245 = vpop.f32.mrb[0].mxu0
    %v246 = vadd.f32 0.0, %v245
    %v247 = vpop.f32.mrb[0].mxu0
    %v248 = vpop.f32.mrb[0].mxu0
    %v249 = vadd.f32 0.0, %v248
    %v250 = vpop.f32.mrb[0].mxu0
    %251 = vdwg.mxu0
    %v252 = vpack.c.bf16 %v193, %v190
    %v253 = vpack.c.bf16 %v201, %v198
    %v254 = vpack.c.bf16 %v209, %v206
    %v255 = vpack.c.bf16 %v217, %v214
    %v256 = vpack.c.bf16 %v225, %v222
    %v257 = vpack.c.bf16 %v233, %v230
    %v258 = vpack.c.bf16 %v241, %v238
    %v259 = vpack.c.bf16 %v249, %v246
    %s260 = sshra.s32 %s18, 4
    %s261 = sand.u32 %s18, 15
    %s262 = smul.addr %s260, 8
    %s263 = scalar_lea.vmem [#allocation2], %s262
    %264 = vst [vmem:[%s263] sm:$0xff] %v252
    %265 = vst [vmem:[%s263 + $0x8] sm:$0xff] %v253
    %266 = vst [vmem:[%s263 + $0x10] sm:$0xff] %v254
    %267 = vst [vmem:[%s263 + $0x18] sm:$0xff] %v255
    %268 = vst [vmem:[%s263 + $0x20] sm:$0xff] %v256
    %269 = vst [vmem:[%s263 + $0x28] sm:$0xff] %v257
    %270 = vst [vmem:[%s263 + $0x30] sm:$0xff] %v258
    %271 = vst [vmem:[%s263 + $0x38] sm:$0xff] %v259
  $region21: #{graph_encoder_forward.2} parent=0 // pred_fallthru
    _
  %p272 = scmp.eq.s32.totalorder 0, 0
  // Predicated region
  $region22: #{graph_encoder_forward.2} parent=0 // pred_check
    %p273 = pneg %p272
  $region23: #{graph_encoder_forward.2} parent=0 // pred_check_branch
    %275 = sbr.rel (%p273) target = $region25
  $region24: #{graph_encoder_forward.2} parent=0 // pred_region
    %276 = vst [vmem:[#allocation3] sm:$0xff] 0.0
    %277 = vst [vmem:[#allocation3 + $0x8] sm:$0xff] 0.0
    %278 = vst [vmem:[#allocation3 + $0x10] sm:$0xff] 0.0
    %279 = vst [vmem:[#allocation3 + $0x18] sm:$0xff] 0.0
    %280 = vst [vmem:[#allocation3 + $0x20] sm:$0xff] 0.0
    %281 = vst [vmem:[#allocation3 + $0x28] sm:$0xff] 0.0
    %282 = vst [vmem:[#allocation3 + $0x30] sm:$0xff] 0.0
    %283 = vst [vmem:[#allocation3 + $0x38] sm:$0xff] 0.0
    %284 = vst [vmem:[#allocation3 + $0x40] sm:$0xff] 0.0
    %285 = vst [vmem:[#allocation3 + $0x48] sm:$0xff] 0.0
    %286 = vst [vmem:[#allocation3 + $0x50] sm:$0xff] 0.0
    %287 = vst [vmem:[#allocation3 + $0x58] sm:$0xff] 0.0
    %288 = vst [vmem:[#allocation3 + $0x60] sm:$0xff] 0.0
    %289 = vst [vmem:[#allocation3 + $0x68] sm:$0xff] 0.0
    %290 = vst [vmem:[#allocation3 + $0x70] sm:$0xff] 0.0
    %291 = vst [vmem:[#allocation3 + $0x78] sm:$0xff] 0.0
  $region25: #{graph_encoder_forward.2} parent=0 // pred_fallthru
    _
  %v292 = vld [vmem:[#allocation3] sm:$0xff]
  %v293 = vld [vmem:[#allocation3 + $0x8] sm:$0xff]
  %v294 = vld [vmem:[#allocation3 + $0x10] sm:$0xff]
  %v295 = vld [vmem:[#allocation3 + $0x18] sm:$0xff]
  %v296 = vld [vmem:[#allocation3 + $0x20] sm:$0xff]
  %v297 = vld [vmem:[#allocation3 + $0x28] sm:$0xff]
  %v298 = vld [vmem:[#allocation3 + $0x30] sm:$0xff]
  %v299 = vld [vmem:[#allocation3 + $0x38] sm:$0xff]
  %v300 = vld [vmem:[#allocation3 + $0x40] sm:$0xff]
  %v301 = vld [vmem:[#allocation3 + $0x48] sm:$0xff]
  %v302 = vld [vmem:[#allocation3 + $0x50] sm:$0xff]
  %v303 = vld [vmem:[#allocation3 + $0x58] sm:$0xff]
  %v304 = vld [vmem:[#allocation3 + $0x60] sm:$0xff]
  %v305 = vld [vmem:[#allocation3 + $0x68] sm:$0xff]
  %v306 = vld [vmem:[#allocation3 + $0x70] sm:$0xff]
  %v307 = vld [vmem:[#allocation3 + $0x78] sm:$0xff]
  %v308 = vld [vmem:[%s0] sm:$0xf]
  %v309 = vld [vmem:[%s0 + $0x4] sm:$0xf]
  %v310 = vld [vmem:[%s0 + $0x8] sm:$0xf]
  %v311 = vld [vmem:[%s0 + $0xc] sm:$0xf]
  %v312 = vld [vmem:[%s0 + $0x10] sm:$0xf]
  %v313 = vld [vmem:[%s0 + $0x14] sm:$0xf]
  %v314 = vld [vmem:[%s0 + $0x18] sm:$0xf]
  %v315 = vld [vmem:[%s0 + $0x1c] sm:$0xf]
  %v316 = vld [vmem:[%s0 + $0x20] sm:$0xf]
  %v317 = vld [vmem:[%s0 + $0x24] sm:$0xf]
  %v318 = vld [vmem:[%s0 + $0x28] sm:$0xf]
  %v319 = vld [vmem:[%s0 + $0x2c] sm:$0xf]
  %v320 = vld [vmem:[%s0 + $0x30] sm:$0xf]
  %v321 = vld [vmem:[%s0 + $0x34] sm:$0xf]
  %v322 = vld [vmem:[%s0 + $0x38] sm:$0xf]
  %v323 = vld [vmem:[%s0 + $0x3c] sm:$0xf]
  %s324 = sshra.s32 %s18, 4
  %s325 = sand.u32 %s18, 15
  %s326 = smul.addr %s324, 8
  %s327 = scalar_lea.vmem [#allocation2], %s326
  %v328 = vld [vmem:[%s327] sm:$0xff]
  %v329 = vld [vmem:[%s327 + $0x8] sm:$0xff]
  %v330 = vld [vmem:[%s327 + $0x10] sm:$0xff]
  %v331 = vld [vmem:[%s327 + $0x18] sm:$0xff]
  %v332 = vld [vmem:[%s327 + $0x20] sm:$0xff]
  %v333 = vld [vmem:[%s327 + $0x28] sm:$0xff]
  %v334 = vld [vmem:[%s327 + $0x30] sm:$0xff]
  %v335 = vld [vmem:[%s327 + $0x38] sm:$0xff]
  %v352 = vunpack.c.l.b16 %v308
  %v353 = vunpack.c.l.b16 %v309
  %v354 = vunpack.c.l.b16 %v310
  %v355 = vunpack.c.l.b16 %v311
  %v356 = vunpack.c.l.b16 %v312
  %v357 = vunpack.c.l.b16 %v313
  %v358 = vunpack.c.l.b16 %v314
  %v359 = vunpack.c.l.b16 %v315
  %v360 = vunpack.c.l.b16 %v316
  %v361 = vunpack.c.l.b16 %v317
  %v362 = vunpack.c.l.b16 %v318
  %v363 = vunpack.c.l.b16 %v319
  %v364 = vunpack.c.l.b16 %v320
  %v365 = vunpack.c.l.b16 %v321
  %v366 = vunpack.c.l.b16 %v322
  %v367 = vunpack.c.l.b16 %v323
  %v368 = vpack.c.b16 %v353, %v352
  %v369 = vpack.c.b16 %v355, %v354
  %v370 = vpack.c.b16 %v357, %v356
  %v371 = vpack.c.b16 %v359, %v358
  %v372 = vpack.c.b16 %v361, %v360
  %v373 = vpack.c.b16 %v363, %v362
  %v374 = vpack.c.b16 %v365, %v364
  %v375 = vpack.c.b16 %v367, %v366
  %384 = vmatprep.subr.bf16.mxu0 0
  %385 = vmatpush1.bf16.msra.mxu0 %v328
  %386 = vmatprep.subr.bf16.mxu0 0
  %387 = vmatpush1.bf16.msra.mxu0 %v329
  %388 = vmatprep.subr.bf16.mxu0 0
  %389 = vmatpush1.bf16.msra.mxu0 %v330
  %390 = vmatprep.subr.bf16.mxu0 0
  %391 = vmatpush1.bf16.msra.mxu0 %v331
  %392 = vmatprep.subr.bf16.mxu0 0
  %393 = vmatpush1.bf16.msra.mxu0 %v332
  %394 = vmatprep.subr.bf16.mxu0 0
  %395 = vmatpush1.bf16.msra.mxu0 %v333
  %396 = vmatprep.subr.bf16.mxu0 0
  %397 = vmatpush1.bf16.msra.mxu0 %v334
  %398 = vmatprep.subr.bf16.mxu0 0
  %399 = vmatpush1.bf16.msra.mxu0 %v335
  %400 = vmatprep.subr.bf16.mxu0 0
  %401 = vmatpush1.bf16.msra.mxu0 0
  %402 = vmatprep.subr.bf16.mxu0 0
  %403 = vmatpush1.bf16.msra.mxu0 0
  %404 = vmatprep.subr.bf16.mxu0 0
  %405 = vmatpush1.bf16.msra.mxu0 0
  %406 = vmatprep.subr.bf16.mxu0 0
  %407 = vmatpush1.bf16.msra.mxu0 0
  %408 = vmatprep.subr.bf16.mxu0 0
  %409 = vmatpush1.bf16.msra.mxu0 0
  %410 = vmatprep.subr.bf16.mxu0 0
  %411 = vmatpush1.bf16.msra.mxu0 0
  %412 = vmatprep.subr.bf16.mxu0 0
  %413 = vmatpush1.bf16.msra.mxu0 0
  %414 = vmatprep.subr.bf16.mxu0 0
  %415 = vmatpush1.bf16.msra.mxu0 0
  %416 = vmatprep.mubr.bf16.mxu0 0
  %417 = vmatmul.mubr.bf16.gmra.mrb[0].mxu0 %v368
  %v418 = vpop.f32.mrb[0].mxu0
  %v419 = vadd.f32 0.0, %v418
  %v420 = vpop.f32.mrb[0].mxu0
  %v421 = vpop.f32.mrb[0].mxu0
  %v422 = vadd.f32 0.0, %v421
  %v423 = vpop.f32.mrb[0].mxu0
  %424 = vmatprep.mubr.bf16.mxu0 0
  %425 = vmatmul.mubr.bf16.gmra.mrb[0].mxu0 %v369
  %v426 = vpop.f32.mrb[0].mxu0
  %v427 = vadd.f32 0.0, %v426
  %v428 = vpop.f32.mrb[0].mxu0
  %v429 = vpop.f32.mrb[0].mxu0
  %v430 = vadd.f32 0.0, %v429
  %v431 = vpop.f32.mrb[0].mxu0
  %432 = vmatprep.mubr.bf16.mxu0 0
  %433 = vmatmul.mubr.bf16.gmra.mrb[0].mxu0 %v370
  %v434 = vpop.f32.mrb[0].mxu0
  %v435 = vadd.f32 0.0, %v434
  %v436 = vpop.f32.mrb[0].mxu0
  %v437 = vpop.f32.mrb[0].mxu0
  %v438 = vadd.f32 0.0, %v437
  %v439 = vpop.f32.mrb[0].mxu0
  %440 = vmatprep.mubr.bf16.mxu0 0
  %441 = vmatmul.mubr.bf16.gmra.mrb[0].mxu0 %v371
  %v442 = vpop.f32.mrb[0].mxu0
  %v443 = vadd.f32 0.0, %v442
  %v444 = vpop.f32.mrb[0].mxu0
  %v445 = vpop.f32.mrb[0].mxu0
  %v446 = vadd.f32 0.0, %v445
  %v447 = vpop.f32.mrb[0].mxu0
  %448 = vmatprep.mubr.bf16.mxu0 0
  %449 = vmatmul.mubr.bf16.gmra.mrb[0].mxu0 %v372
  %v450 = vpop.f32.mrb[0].mxu0
  %v451 = vadd.f32 0.0, %v450
  %v452 = vpop.f32.mrb[0].mxu0
  %v453 = vpop.f32.mrb[0].mxu0
  %v454 = vadd.f32 0.0, %v453
  %v455 = vpop.f32.mrb[0].mxu0
  %456 = vmatprep.mubr.bf16.mxu0 0
  %457 = vmatmul.mubr.bf16.gmra.mrb[0].mxu0 %v373
  %v458 = vpop.f32.mrb[0].mxu0
  %v459 = vadd.f32 0.0, %v458
  %v460 = vpop.f32.mrb[0].mxu0
  %v461 = vpop.f32.mrb[0].mxu0
  %v462 = vadd.f32 0.0, %v461
  %v463 = vpop.f32.mrb[0].mxu0
  %464 = vmatprep.mubr.bf16.mxu0 0
  %465 = vmatmul.mubr.bf16.gmra.mrb[0].mxu0 %v374
  %v466 = vpop.f32.mrb[0].mxu0
  %v467 = vadd.f32 0.0, %v466
  %v468 = vpop.f32.mrb[0].mxu0
  %v469 = vpop.f32.mrb[0].mxu0
  %v470 = vadd.f32 0.0, %v469
  %v471 = vpop.f32.mrb[0].mxu0
  %472 = vmatprep.mubr.bf16.mxu0 0
  %473 = vmatmul.mubr.bf16.gmra.mrb[0].mxu0 %v375
  %v474 = vpop.f32.mrb[0].mxu0
  %v475 = vadd.f32 0.0, %v474
  %v476 = vpop.f32.mrb[0].mxu0
  %v477 = vpop.f32.mrb[0].mxu0
  %v478 = vadd.f32 0.0, %v477
  %v479 = vpop.f32.mrb[0].mxu0
  %480 = vdwg.mxu0
  %v481 = vadd.f32 %v292, %v419
  %v482 = vadd.f32 %v293, %v422
  %v483 = vadd.f32 %v294, %v427
  %v484 = vadd.f32 %v295, %v430
  %v485 = vadd.f32 %v296, %v435
  %v486 = vadd.f32 %v297, %v438
  %v487 = vadd.f32 %v298, %v443
  %v488 = vadd.f32 %v299, %v446
  %v489 = vadd.f32 %v300, %v451
  %v490 = vadd.f32 %v301, %v454
  %v491 = vadd.f32 %v302, %v459
  %v492 = vadd.f32 %v303, %v462
  %v493 = vadd.f32 %v304, %v467
  %v494 = vadd.f32 %v305, %v470
  %v495 = vadd.f32 %v306, %v475
  %v496 = vadd.f32 %v307, %v478
  %497 = vst [vmem:[#allocation3] sm:$0xff] %v481
  %498 = vst [vmem:[#allocation3 + $0x8] sm:$0xff] %v482
  %499 = vst [vmem:[#allocation3 + $0x10] sm:$0xff] %v483
  %500 = vst [vmem:[#allocation3 + $0x18] sm:$0xff] %v484
  %501 = vst [vmem:[#allocation3 + $0x20] sm:$0xff] %v485
  %502 = vst [vmem:[#allocation3 + $0x28] sm:$0xff] %v486
  %503 = vst [vmem:[#allocation3 + $0x30] sm:$0xff] %v487
  %504 = vst [vmem:[#allocation3 + $0x38] sm:$0xff] %v488
  %505 = vst [vmem:[#allocation3 + $0x40] sm:$0xff] %v489
  %506 = vst [vmem:[#allocation3 + $0x48] sm:$0xff] %v490
  %507 = vst [vmem:[#allocation3 + $0x50] sm:$0xff] %v491
  %508 = vst [vmem:[#allocation3 + $0x58] sm:$0xff] %v492
  %509 = vst [vmem:[#allocation3 + $0x60] sm:$0xff] %v493
  %510 = vst [vmem:[#allocation3 + $0x68] sm:$0xff] %v494
  %511 = vst [vmem:[#allocation3 + $0x70] sm:$0xff] %v495
  %512 = vst [vmem:[#allocation3 + $0x78] sm:$0xff] %v496
  // Predicated region
  $region26: #{graph_encoder_forward.2} parent=0 // pred_check
    %p513 = pneg %p272
  $region27: #{graph_encoder_forward.2} parent=0 // pred_check_branch
    %515 = sbr.rel (%p513) target = $region29
  $region28: #{graph_encoder_forward.2} parent=0 // pred_region
    %v516 = vld [vmem:[#allocation3] sm:$0xff]
    %v517 = vld [vmem:[#allocation3 + $0x8] sm:$0xff]
    %v518 = vld [vmem:[#allocation3 + $0x10] sm:$0xff]
    %v519 = vld [vmem:[#allocation3 + $0x18] sm:$0xff]
    %v520 = vld [vmem:[#allocation3 + $0x20] sm:$0xff]
    %v521 = vld [vmem:[#allocation3 + $0x28] sm:$0xff]
    %v522 = vld [vmem:[#allocation3 + $0x30] sm:$0xff]
    %v523 = vld [vmem:[#allocation3 + $0x38] sm:$0xff]
    %v524 = vld [vmem:[#allocation3 + $0x40] sm:$0xff]
    %v525 = vld [vmem:[#allocation3 + $0x48] sm:$0xff]
    %v526 = vld [vmem:[#allocation3 + $0x50] sm:$0xff]
    %v527 = vld [vmem:[#allocation3 + $0x58] sm:$0xff]
    %v528 = vld [vmem:[#allocation3 + $0x60] sm:$0xff]
    %v529 = vld [vmem:[#allocation3 + $0x68] sm:$0xff]
    %v530 = vld [vmem:[#allocation3 + $0x70] sm:$0xff]
    %v531 = vld [vmem:[#allocation3 + $0x78] sm:$0xff]
    %v532 = vld [vmem:[%s3] sm:$0x1]
    %v534 = vlaneseq
    %v535 = vshrl.u32 %v534, 7
    %v536 = vsub.s32 0, %v535
    %v537 = vrot.slane %v532, %v536
    %v539 = vadd.f32 %v516, %v537
    %v540 = vadd.f32 %v517, %v537
    %v541 = vadd.f32 %v518, %v537
    %v542 = vadd.f32 %v519, %v537
    %v543 = vadd.f32 %v520, %v537
    %v544 = vadd.f32 %v521, %v537
    %v545 = vadd.f32 %v522, %v537
    %v546 = vadd.f32 %v523, %v537
    %v547 = vadd.f32 %v524, %v537
    %v548 = vadd.f32 %v525, %v537
    %v549 = vadd.f32 %v526, %v537
    %v550 = vadd.f32 %v527, %v537
    %v551 = vadd.f32 %v528, %v537
    %v552 = vadd.f32 %v529, %v537
    %v553 = vadd.f32 %v530, %v537
    %v554 = vadd.f32 %v531, %v537
    %v555 = vmax.f32 %v539, 0.0
    %v556 = vmax.f32 %v540, 0.0
    %v557 = vmax.f32 %v541, 0.0
    %v558 = vmax.f32 %v542, 0.0
    %v559 = vmax.f32 %v543, 0.0
    %v560 = vmax.f32 %v544, 0.0
    %v561 = vmax.f32 %v545, 0.0
    %v562 = vmax.f32 %v546, 0.0
    %v563 = vmax.f32 %v547, 0.0
    %v564 = vmax.f32 %v548, 0.0
    %v565 = vmax.f32 %v549, 0.0
    %v566 = vmax.f32 %v550, 0.0
    %v567 = vmax.f32 %v551, 0.0
    %v568 = vmax.f32 %v552, 0.0
    %v569 = vmax.f32 %v553, 0.0
    %v570 = vmax.f32 %v554, 0.0
    %v571 = vpack.c.bf16 %v556, %v555
    %v572 = vpack.c.bf16 %v558, %v557
    %v573 = vpack.c.bf16 %v560, %v559
    %v574 = vpack.c.bf16 %v562, %v561
    %v575 = vpack.c.bf16 %v564, %v563
    %v576 = vpack.c.bf16 %v566, %v565
    %v577 = vpack.c.bf16 %v568, %v567
    %v578 = vpack.c.bf16 %v570, %v569
    %v587 = vunpack.c.l.b16 %v571
    %v588 = vunpack.c.h.b16 %v571
    %v589 = vunpack.c.l.b16 %v572
    %v590 = vunpack.c.h.b16 %v572
    %v591 = vunpack.c.l.b16 %v573
    %v592 = vunpack.c.h.b16 %v573
    %v593 = vunpack.c.l.b16 %v574
    %v594 = vunpack.c.h.b16 %v574
    %v595 = vunpack.c.l.b16 %v575
    %v596 = vunpack.c.h.b16 %v575
    %v597 = vunpack.c.l.b16 %v576
    %v598 = vunpack.c.h.b16 %v576
    %v599 = vunpack.c.l.b16 %v577
    %v600 = vunpack.c.h.b16 %v577
    %v601 = vunpack.c.l.b16 %v578
    %v602 = vunpack.c.h.b16 %v578
    %v603 = vpack.c.b16 %v587, %v587
    %v604 = vpack.c.b16 %v588, %v588
    %v605 = vpack.c.b16 %v589, %v589
    %v606 = vpack.c.b16 %v590, %v590
    %v607 = vpack.c.b16 %v591, %v591
    %v608 = vpack.c.b16 %v592, %v592
    %v609 = vpack.c.b16 %v593, %v593
    %v610 = vpack.c.b16 %v594, %v594
    %v611 = vpack.c.b16 %v595, %v595
    %v612 = vpack.c.b16 %v596, %v596
    %v613 = vpack.c.b16 %v597, %v597
    %v614 = vpack.c.b16 %v598, %v598
    %v615 = vpack.c.b16 %v599, %v599
    %v616 = vpack.c.b16 %v600, %v600
    %v617 = vpack.c.b16 %v601, %v601
    %v618 = vpack.c.b16 %v602, %v602
    %635 = vst [vmem:[%s4] sm:$0xf] %v603
    %636 = vst [vmem:[%s4 + $0x4] sm:$0xf] %v604
    %637 = vst [vmem:[%s4 + $0x8] sm:$0xf] %v605
    %638 = vst [vmem:[%s4 + $0xc] sm:$0xf] %v606
    %639 = vst [vmem:[%s4 + $0x10] sm:$0xf] %v607
    %640 = vst [vmem:[%s4 + $0x14] sm:$0xf] %v608
    %641 = vst [vmem:[%s4 + $0x18] sm:$0xf] %v609
    %642 = vst [vmem:[%s4 + $0x1c] sm:$0xf] %v610
    %643 = vst [vmem:[%s4 + $0x20] sm:$0xf] %v611
    %644 = vst [vmem:[%s4 + $0x24] sm:$0xf] %v612
    %645 = vst [vmem:[%s4 + $0x28] sm:$0xf] %v613
    %646 = vst [vmem:[%s4 + $0x2c] sm:$0xf] %v614
    %647 = vst [vmem:[%s4 + $0x30] sm:$0xf] %v615
    %648 = vst [vmem:[%s4 + $0x34] sm:$0xf] %v616
    %649 = vst [vmem:[%s4 + $0x38] sm:$0xf] %v617
    %650 = vst [vmem:[%s4 + $0x3c] sm:$0xf] %v618
  $region29: #{graph_encoder_forward.2} parent=0 // pred_fallthru
    _
  // Predicated region
  $region30: #{graph_encoder_forward.2} parent=0 // pred_check
    _
  $region31: #{graph_encoder_forward.2} parent=0 // pred_check_branch
    %652 = sbr.rel (0) target = $region33
  $region32: #{graph_encoder_forward.2} parent=0 // pred_region
    _
  $region33: #{graph_encoder_forward.2} parent=0 // pred_fallthru
    _
  // Predicated region
  $region34: #{graph_encoder_forward.2} parent=0 // pred_check
    _
  $region35: #{graph_encoder_forward.2} parent=0 // pred_check_branch
    %654 = sbr.rel (0) target = $region37
  $region36: #{graph_encoder_forward.2} parent=0 // pred_region
    _
  $region37: #{graph_encoder_forward.2} parent=0 // pred_fallthru
    _

</llo_original>
